<compile_context>
chip_gen: v7x
topology: tpu7x:2x2x1
jax: 0.10.0
libtpu: 0.0.40
codegen_flags: <defaults>
</compile_context>

<pallas_src>
import functools

import jax
import jax.numpy as jnp
import numpy as np
from jax import lax
from jax.experimental import pallas as pl
from jax.experimental.pallas import tpu as pltpu


# ----------------------------------------------------------------------------
# Kernel: grid = (K hops, N//TM row tiles), K outer / row tiles inner.
#   adj_ref : (TM, N)     bf16  row tile of the row-normalized adjacency
#   feat_ref: (TM, Din)   bf16  row tile of the input features (read only at k==0)
#   w_ref   : (Din, Dout) bf16  hop-k weight, pre-transposed (x @ W == x @ weight.T)
#   prm_ref : (3, Dout)   f32   packed [f_bias; scale; offset] for hop k
#   out_ref : (TM, Dout)  f32   columns [k*Dout, (k+1)*Dout) of the fused concat output
#   hop_ref : (2, N, Din) bf16  ping-pong carry of feat_hop[k] over the whole node set
#   cur_ref : (TM, Din)   bf16  this tile's rows of the CURRENT hop (branch-written)
# ----------------------------------------------------------------------------
def hoa_kernel(adj_ref, feat_ref, w_ref, prm_ref, out_ref, hop_ref, cur_ref):
    k = pl.program_id(0)
    n_hops = pl.num_programs(0)
    t = pl.program_id(1)
    tm = adj_ref.shape[0]
    row0 = pl.multiple_of(t * tm, tm)
    parity = k % 2                      # hop k lives in ping-pong slot (k & 1)

    # ---- hop propagation for this row tile --------------------------------
    @pl.when(k == 0)
    def _():
        # feat_hop[0] = feat_in (nn.Dropout is identity at p=0 / eval mode).
        rows = feat_ref[...]
        cur_ref[...] = rows
        hop_ref[0, pl.ds(row0, tm), :] = rows          # seed the carry for hop 1

    def _propagate(dst_slot, src_slot):
        # feat_hop[k][rows] = adj_norm[rows, :] @ feat_hop[k-1]
        # (slot src_slot was fully written during hop k-1 over all row tiles).
        new_rows = jnp.dot(adj_ref[...], hop_ref[src_slot],
                           preferred_element_type=jnp.float32).astype(jnp.bfloat16)
        cur_ref[...] = new_rows

        # Persist the carry only if a later hop will read it.
        @pl.when(k + 1 < n_hops)
        def _():
            hop_ref[dst_slot, pl.ds(row0, tm), :] = new_rows

    @pl.when(jnp.logical_and(k > 0, parity == 1))
    def _():
        _propagate(1, 0)

    @pl.when(jnp.logical_and(k > 0, parity == 0))
    def _():
        _propagate(0, 1)

    h_rows = cur_ref[...]                                       # (TM, Din) bf16

    params = prm_ref[...]                                       # (3, Dout) f32
    f_bias = params[0:1, :]
    scale = params[1:2, :]
    offset = params[2:3, :]

    # Linear (bias-free nn.Linear) + explicit f_bias, then ReLU.  bf16 x bf16 -> f32.
    h = jnp.dot(h_rows, w_ref[...], preferred_element_type=jnp.float32)
    h = jnp.maximum(h + f_bias, 0.0)                            # act == 'relu'

    # bias == 'norm': single-pass mean / biased-var over the feature dim (dim=1).
    inv_d = 1.0 / h.shape[1]
    s = jnp.sum(h, axis=1, keepdims=True)
    ss = jnp.sum(h * h, axis=1, keepdims=True)
    mean = s * inv_d
    var = ss * inv_d - mean * mean + 1e-9
    rs = scale * lax.rsqrt(var)                                 # fold scale into rsqrt
    out_ref[...] = (h - mean) * rs + offset


def _pick_block_rows(n):
    for tm in (512, 256, 128, 64, 32, 16):
        if n % tm == 0:
            return tm
    return n


def hoa_forward(adj, feat, W, f_bias, scale, offset, *, aggr="concat",
                block_rows=None):
    """adj: [N,N]  feat: [N,Din]  W: [K,Din,Dout] (pre-transposed)  params: [K,Dout]."""
    K, Din, Dout = W.shape
    N = feat.shape[0]
    assert adj.shape == (N, N)
    # Fused lane-dense concat output needs Dout aligned to the 128-lane vreg width.
    # TODO(synk): add a padded / non-fused output path for Dout % 128 != 0.
    assert Dout % 128 == 0, "Dout must be a multiple of 128 for the fused concat path"

    TM = block_rows if block_rows is not None else _pick_block_rows(N)
    assert N % TM == 0 and TM % 16 == 0, "row tile must divide N and be 16-aligned"
    T = N // TM

    # bf16 MXU operands, f32 accumulation.  Normalization params stay f32.
    adj_bf = adj.astype(jnp.bfloat16)
    feat_bf = feat.astype(jnp.bfloat16)
    w_bf = W.astype(jnp.bfloat16)
    params = jnp.stack([f_bias, scale, offset], axis=1).astype(jnp.float32)  # (K,3,Dout)

    # Explicit VMEM budget: double-buffered streamed blocks + resident hop carry.
    est = (2 * TM * N * 2            # adj tiles (bf16)
           + 2 * TM * Din * 2        # feat tiles (bf16)
           + 2 * Din * Dout * 2      # W (bf16)
           + 2 * 3 * max(Dout, 128) * 4
           + 2 * TM * Dout * 4       # out tiles (f32)
           + 2 * N * Din * 2         # ping-pong hop carry (bf16)
           + TM * Din * 2)           # current-tile hop rows (bf16)
    vmem_limit = int(min(max(2 * est, 32 * 1024 * 1024), 64 * 1024 * 1024))

    cost = pl.CostEstimate(
        flops=2 * (K - 1) * N * N * Din + 2 * K * N * Din * Dout,
        transcendentals=K * N,                              # one rsqrt per row per hop
        bytes_accessed=((K - 1) * N * N * 2 + N * Din * 2 + K * Din * Dout * 2
                        + K * 3 * Dout * 4 + N * K * Dout * 4),
    )

    out = pl.pallas_call(
        hoa_kernel,
        out_shape=jax.ShapeDtypeStruct((N, K * Dout), jnp.float32),
        grid_spec=pltpu.PrefetchScalarGridSpec(
            num_scalar_prefetch=0,
            grid=(K, T),                                   # hop outer, row tiles inner
            in_specs=[
                # adj row tile; not read at k==0, so pin to block 0 there.  The
                # unchanged block index lets Pallas skip the redundant DMAs, and
                # the k==0 -> k==1 transition reuses block (0,0) for free.
                pl.BlockSpec((TM, N), lambda k, t: (jnp.where(k == 0, 0, t), 0)),
                # feat row tile; only read at k==0.  Pin to the LAST tile for
                # k>0 so the block index never changes again -> no redundant DMA.
                pl.BlockSpec((TM, Din),
                             lambda k, t, T=T: (jnp.where(k == 0, t, T - 1), 0)),
                pl.BlockSpec((pl.Squeezed(), Din, Dout), lambda k, t: (k, 0, 0)),
                pl.BlockSpec((pl.Squeezed(), 3, Dout), lambda k, t: (k, 0, 0)),
            ],
            # Fused 'concat': hop k writes columns [k*Dout, (k+1)*Dout) -> lane-dense.
            out_specs=pl.BlockSpec((TM, Dout), lambda k, t: (t, k)),
            scratch_shapes=[pltpu.VMEM((2, N, Din), jnp.bfloat16),
                            pltpu.VMEM((TM, Din), jnp.bfloat16)],
        ),
        compiler_params=pltpu.CompilerParams(
            # hop k needs the fully-written hop k-1 carry -> both axes sequential.
            # TODO(synk): v7x dual-TC needs a shared (VMEM_SHARED/HBM) hop carry
            # before the row-tile axis can be marked "parallel".
            dimension_semantics=("arbitrary", "arbitrary"),
            vmem_limit_bytes=vmem_limit,
        ),
        cost_estimate=cost,
    )(adj_bf, feat_bf, w_bf, params)

    if aggr == "concat":
        return out                                   # already torch.cat(feats, dim=1)
    if aggr == "mean":
        return out.reshape(N, K, Dout).mean(axis=1)
    raise ValueError(aggr)


# Pure-JAX reference of the PyTorch forward.  With bf16_operands=True it mirrors
# the kernel's bf16-operand / f32-accumulate matmuls (for a tight correctness check).
def hoa_reference(adj, feat, W, f_bias, scale, offset, *, order, aggr="concat",
                  bf16_operands=False):
    dot = functools.partial(jnp.dot, precision=lax.Precision.HIGHEST)
    q = ((lambda x: x.astype(jnp.bfloat16).astype(jnp.float32))
         if bf16_operands else (lambda x: x))
    adj_q, w_q = q(adj), q(W)
    hops = [q(feat)]
    for _ in range(order):
        hops.append(q(dot(adj_q, hops[-1])))
    parts = []
    for k in range(order + 1):
        h = jnp.maximum(dot(hops[k], w_q[k]) + f_bias[k], 0.0)
        m = jnp.mean(h, axis=1, keepdims=True)
        v = jnp.mean((h - m) ** 2, axis=1, keepdims=True) + 1e-9
        parts.append((h - m) * scale[k] * lax.rsqrt(v) + offset[k])
    if aggr == "concat":
        return jnp.concatenate(parts, axis=1)
    return jnp.mean(jnp.stack(parts, 0), axis=0)


if __name__ == "__main__":
    # Small, lane-aligned synthetic problem consistent with HOA's forward.
    N, DIM_IN, DIM_OUT, ORDER = 256, 128, 128, 2
    K = ORDER + 1
    TM = 128                                   # 2 row tiles -> tiling path exercised

    key = jax.random.PRNGKey(0)
    k_adj, k_feat, k_w, k_b, k_s, k_o = jax.random.split(key, 6)

    # Row-normalized dense adjacency (stands in for the sparse adj_norm;
    # torch.spmm(sparse, dense) == dense matmul numerically).
    adj_raw = jnp.abs(jax.random.normal(k_adj, (N, N), dtype=jnp.float32))
    adj = adj_raw / jnp.sum(adj_raw, axis=1, keepdims=True)

    feat = jax.random.normal(k_feat, (N, DIM_IN), dtype=jnp.float32)

    # f_lin[k].weight is [Dout, Din]; stored pre-transposed as W[k] = weight.T.
    W = jax.random.normal(k_w, (K, DIM_IN, DIM_OUT), dtype=jnp.float32) * 0.1
    f_bias = 0.1 * jax.random.normal(k_b, (K, DIM_OUT), dtype=jnp.float32)
    scale = 1.0 + 0.2 * jax.random.normal(k_s, (K, DIM_OUT), dtype=jnp.float32)
    offset = 0.2 * jax.random.normal(k_o, (K, DIM_OUT), dtype=jnp.float32)

    # TODO(synk): training-mode stochastic dropout and the 'norm-nn' BatchNorm1d
    # branch are not implemented (dropout is identity here; bias mode is 'norm').

    run = jax.jit(functools.partial(hoa_forward, aggr="concat", block_rows=TM))
    out = jax.block_until_ready(run(adj, feat, W, f_bias, scale, offset))
    assert out.shape == (N, K * DIM_OUT)

    # Tight check against a reference with the same bf16-operand matmuls ...
    ref_q = hoa_reference(adj, feat, W, f_bias, scale, offset,
                          order=ORDER, aggr="concat", bf16_operands=True)
    np.testing.assert_allclose(np.asarray(out), np.asarray(ref_q),
                               rtol=1e-2, atol=1e-2)
    # ... and a loose check against the exact-f32, PyTorch-faithful math.
    ref_f = hoa_reference(adj, feat, W, f_bias, scale, offset,
                          order=ORDER, aggr="concat", bf16_operands=False)
    np.testing.assert_allclose(np.asarray(out), np.asarray(ref_f),
                               rtol=1e-1, atol=1e-1)

    print("KERNEL_OK")
</pallas_src>

<mosaic_0001>
module attributes {stable_mosaic.version = 11 : i64} {
  func.func @hoa_kernel(%arg0: i32, %arg1: i32, %arg2: memref<128x256xbf16, #tpu.memory_space<vmem>>, %arg3: memref<128x128xbf16, #tpu.memory_space<vmem>>, %arg4: memref<1x128x128xbf16, #tpu.memory_space<vmem>>, %arg5: memref<1x3x128xf32, #tpu.memory_space<vmem>>, %arg6: memref<128x128xf32, #tpu.memory_space<vmem>>, %arg7: memref<2x256x128xbf16, #tpu.memory_space<vmem>>, %arg8: memref<128x128xbf16, #tpu.memory_space<vmem>>) attributes {dimension_semantics = [#tpu.dimension_semantics<arbitrary>, #tpu.dimension_semantics<arbitrary>], iteration_bounds = array<i64: 3, 2>, scalar_prefetch = 0 : i64, scratch_operands = 2 : i64, tpu.core_type = #tpu.core_type<tc>, window_params = [{transform_indices = @transform_0, window_bounds = array<i64: 128, 256>}, {transform_indices = @transform_1, window_bounds = array<i64: 128, 128>}, {transform_indices = @transform_2, window_bounds = array<i64: 1, 128, 128>}, {transform_indices = @transform_3, window_bounds = array<i64: 1, 3, 128>}, {transform_indices = @transform_4, window_bounds = array<i64: 128, 128>}]} {
    %c128_i32 = arith.constant 128 : i32
    %0 = arith.muli %arg1, %c128_i32 : i32
    %1 = tpu.assume_multiple %0, 128 : i32
    %c2_i32 = arith.constant 2 : i32
    %c0_i32 = arith.constant 0 : i32
    %2 = arith.cmpi eq, %c2_i32, %c0_i32 : i32
    %c1_i32 = arith.constant 1 : i32
    %3 = arith.select %2, %c1_i32, %c2_i32 : i32
    %4 = arith.remsi %arg0, %3 : i32
    %c0_i32_0 = arith.constant 0 : i32
    %5 = arith.cmpi ne, %4, %c0_i32_0 : i32
    %c0_i32_1 = arith.constant 0 : i32
    %6 = arith.cmpi slt, %4, %c0_i32_1 : i32
    %c0_i32_2 = arith.constant 0 : i32
    %7 = arith.cmpi slt, %3, %c0_i32_2 : i32
    %8 = arith.xori %6, %7 : i1
    %9 = arith.andi %8, %5 : i1
    %10 = arith.addi %4, %3 : i32
    %11 = arith.select %9, %10, %4 : i32
    %c0_i32_3 = arith.constant 0 : i32
    %12 = arith.cmpi eq, %arg0, %c0_i32_3 : i32
    %13 = arith.extui %12 : i1 to i32
    %c0_i32_4 = arith.constant 0 : i32
    %14 = arith.cmpi ne, %13, %c0_i32_4 : i32
    scf.if %14 {
      %c0_26 = arith.constant 0 : index
      %c0_27 = arith.constant 0 : index
      %61 = vector.load %arg3[%c0_26, %c0_27] : memref<128x128xbf16, #tpu.memory_space<vmem>>, vector<128x128xbf16>
      %c0_28 = arith.constant 0 : index
      %c0_29 = arith.constant 0 : index
      %62 = vector.load %arg8[%c0_28, %c0_29] : memref<128x128xbf16, #tpu.memory_space<vmem>>, vector<128x128xbf16>
      tpu.vector_store %arg8[%c0_28, %c0_29], %61 {strides = array<i32>} : memref<128x128xbf16, #tpu.memory_space<vmem>>, vector<128x128xbf16>,
      %c0_30 = arith.constant 0 : index
      %63 = arith.index_cast %1 : i32 to index
      %c0_31 = arith.constant 0 : index
      %64 = vector.load %arg7[%c0_30, %63, %c0_31] : memref<2x256x128xbf16, #tpu.memory_space<vmem>>, vector<1x128x128xbf16>
      %65 = vector.shape_cast %64 : vector<1x128x128xbf16> to vector<128x128xbf16>
      %66 = vector.shape_cast %61 : vector<128x128xbf16> to vector<1x128x128xbf16>
      tpu.vector_store %arg7[%c0_30, %63, %c0_31], %66 {strides = array<i32>} : memref<2x256x128xbf16, #tpu.memory_space<vmem>>, vector<1x128x128xbf16>,
    } else {
    }
    %c0_i32_5 = arith.constant 0 : i32
    %15 = arith.cmpi sgt, %arg0, %c0_i32_5 : i32
    %c1_i32_6 = arith.constant 1 : i32
    %16 = arith.cmpi eq, %11, %c1_i32_6 : i32
    %17 = arith.andi %15, %16 : i1
    %18 = arith.extui %17 : i1 to i32
    %c0_i32_7 = arith.constant 0 : i32
    %19 = arith.cmpi ne, %18, %c0_i32_7 : i32
    scf.if %19 {
      %c0_26 = arith.constant 0 : index
      %c0_27 = arith.constant 0 : index
      %61 = vector.load %arg2[%c0_26, %c0_27] : memref<128x256xbf16, #tpu.memory_space<vmem>>, vector<128x256xbf16>
      %c0_28 = arith.constant 0 : index
      %c0_29 = arith.constant 0 : index
      %c0_30 = arith.constant 0 : index
      %62 = vector.load %arg7[%c0_28, %c0_29, %c0_30] : memref<2x256x128xbf16, #tpu.memory_space<vmem>>, vector<1x256x128xbf16>
      %63 = vector.shape_cast %62 : vector<1x256x128xbf16> to vector<256x128xbf16>
      %cst_31 = arith.constant dense<0.000000e+00> : vector<128x128xf32>
      %64 = tpu.matmul %61, %63, %cst_31 {dimension_numbers = #tpu.dot_dimension_numbers<[1], [0], [0], [1], [0, 0, 1, 1], [], []>} : vector<128x256xbf16>, vector<256x128xbf16>, vector<128x128xf32> -> vector<128x128xf32>
      %65 = arith.truncf %64 : vector<128x128xf32> to vector<128x128xbf16>
      %c0_32 = arith.constant 0 : index
      %c0_33 = arith.constant 0 : index
      %66 = vector.load %arg8[%c0_32, %c0_33] : memref<128x128xbf16, #tpu.memory_space<vmem>>, vector<128x128xbf16>
      tpu.vector_store %arg8[%c0_32, %c0_33], %65 {strides = array<i32>} : memref<128x128xbf16, #tpu.memory_space<vmem>>, vector<128x128xbf16>,
      %c1_i32_34 = arith.constant 1 : i32
      %67 = arith.addi %arg0, %c1_i32_34 : i32
      %c3_i32 = arith.constant 3 : i32
      %68 = arith.cmpi slt, %67, %c3_i32 : i32
      %69 = arith.extui %68 : i1 to i32
      %c0_i32_35 = arith.constant 0 : i32
      %70 = arith.cmpi ne, %69, %c0_i32_35 : i32
      scf.if %70 {
        %c1 = arith.constant 1 : index
        %71 = arith.index_cast %1 : i32 to index
        %c0_36 = arith.constant 0 : index
        %72 = vector.load %arg7[%c1, %71, %c0_36] : memref<2x256x128xbf16, #tpu.memory_space<vmem>>, vector<1x128x128xbf16>
        %73 = vector.shape_cast %72 : vector<1x128x128xbf16> to vector<128x128xbf16>
        %74 = vector.shape_cast %65 : vector<128x128xbf16> to vector<1x128x128xbf16>
        tpu.vector_store %arg7[%c1, %71, %c0_36], %74 {strides = array<i32>} : memref<2x256x128xbf16, #tpu.memory_space<vmem>>, vector<1x128x128xbf16>,
      } else {
      }
    } else {
    }
    %c0_i32_8 = arith.constant 0 : i32
    %20 = arith.cmpi sgt, %arg0, %c0_i32_8 : i32
    %c0_i32_9 = arith.constant 0 : i32
    %21 = arith.cmpi eq, %11, %c0_i32_9 : i32
    %22 = arith.andi %20, %21 : i1
    %23 = arith.extui %22 : i1 to i32
    %c0_i32_10 = arith.constant 0 : i32
    %24 = arith.cmpi ne, %23, %c0_i32_10 : i32
    scf.if %24 {
      %c0_26 = arith.constant 0 : index
      %c0_27 = arith.constant 0 : index
      %61 = vector.load %arg2[%c0_26, %c0_27] : memref<128x256xbf16, #tpu.memory_space<vmem>>, vector<128x256xbf16>
      %c1 = arith.constant 1 : index
      %c0_28 = arith.constant 0 : index
      %c0_29 = arith.constant 0 : index
      %62 = vector.load %arg7[%c1, %c0_28, %c0_29] : memref<2x256x128xbf16, #tpu.memory_space<vmem>>, vector<1x256x128xbf16>
      %63 = vector.shape_cast %62 : vector<1x256x128xbf16> to vector<256x128xbf16>
      %cst_30 = arith.constant dense<0.000000e+00> : vector<128x128xf32>
      %64 = tpu.matmul %61, %63, %cst_30 {dimension_numbers = #tpu.dot_dimension_numbers<[1], [0], [0], [1], [0, 0, 1, 1], [], []>} : vector<128x256xbf16>, vector<256x128xbf16>, vector<128x128xf32> -> vector<128x128xf32>
      %65 = arith.truncf %64 : vector<128x128xf32> to vector<128x128xbf16>
      %c0_31 = arith.constant 0 : index
      %c0_32 = arith.constant 0 : index
      %66 = vector.load %arg8[%c0_31, %c0_32] : memref<128x128xbf16, #tpu.memory_space<vmem>>, vector<128x128xbf16>
      tpu.vector_store %arg8[%c0_31, %c0_32], %65 {strides = array<i32>} : memref<128x128xbf16, #tpu.memory_space<vmem>>, vector<128x128xbf16>,
      %c1_i32_33 = arith.constant 1 : i32
      %67 = arith.addi %arg0, %c1_i32_33 : i32
      %c3_i32 = arith.constant 3 : i32
      %68 = arith.cmpi slt, %67, %c3_i32 : i32
      %69 = arith.extui %68 : i1 to i32
      %c0_i32_34 = arith.constant 0 : i32
      %70 = arith.cmpi ne, %69, %c0_i32_34 : i32
      scf.if %70 {
        %c0_35 = arith.constant 0 : index
        %71 = arith.index_cast %1 : i32 to index
        %c0_36 = arith.constant 0 : index
        %72 = vector.load %arg7[%c0_35, %71, %c0_36] : memref<2x256x128xbf16, #tpu.memory_space<vmem>>, vector<1x128x128xbf16>
        %73 = vector.shape_cast %72 : vector<1x128x128xbf16> to vector<128x128xbf16>
        %74 = vector.shape_cast %65 : vector<128x128xbf16> to vector<1x128x128xbf16>
        tpu.vector_store %arg7[%c0_35, %71, %c0_36], %74 {strides = array<i32>} : memref<2x256x128xbf16, #tpu.memory_space<vmem>>, vector<1x128x128xbf16>,
      } else {
      }
    } else {
    }
    %c0 = arith.constant 0 : index
    %c0_11 = arith.constant 0 : index
    %25 = vector.load %arg8[%c0, %c0_11] : memref<128x128xbf16, #tpu.memory_space<vmem>>, vector<128x128xbf16>
    %c0_12 = arith.constant 0 : index
    %c0_13 = arith.constant 0 : index
    %c0_14 = arith.constant 0 : index
    %26 = vector.load %arg5[%c0_12, %c0_13, %c0_14] : memref<1x3x128xf32, #tpu.memory_space<vmem>>, vector<1x3x128xf32>
    %27 = vector.shape_cast %26 : vector<1x3x128xf32> to vector<3x128xf32>
    %28 = vector.extract_strided_slice %27 {offsets = [0, 0], sizes = [1, 128], strides = [1, 1]} : vector<3x128xf32> to vector<1x128xf32>
    %29 = vector.extract_strided_slice %27 {offsets = [1, 0], sizes = [1, 128], strides = [1, 1]} : vector<3x128xf32> to vector<1x128xf32>
    %30 = vector.extract_strided_slice %27 {offsets = [2, 0], sizes = [1, 128], strides = [1, 1]} : vector<3x128xf32> to vector<1x128xf32>
    %c0_15 = arith.constant 0 : index
    %c0_16 = arith.constant 0 : index
    %c0_17 = arith.constant 0 : index
    %31 = vector.load %arg4[%c0_15, %c0_16, %c0_17] : memref<1x128x128xbf16, #tpu.memory_space<vmem>>, vector<1x128x128xbf16>
    %32 = vector.shape_cast %31 : vector<1x128x128xbf16> to vector<128x128xbf16>
    %cst = arith.constant dense<0.000000e+00> : vector<128x128xf32>
    %33 = tpu.matmul %25, %32, %cst {dimension_numbers = #tpu.dot_dimension_numbers<[1], [0], [0], [1], [0, 0, 1, 1], [], []>} : vector<128x128xbf16>, vector<128x128xbf16>, vector<128x128xf32> -> vector<128x128xf32>
    %34 = vector.broadcast %28 : vector<1x128xf32> to vector<128x128xf32>
    %35 = arith.addf %33, %34 : vector<128x128xf32>
    %cst_18 = arith.constant 0.000000e+00 : f32
    %36 = vector.broadcast %cst_18 : f32 to vector<128x128xf32>
    %37 = arith.maximumf %35, %36 : vector<128x128xf32>
    %cst_19 = arith.constant dense<0.000000e+00> : vector<128xf32>
    %38 = vector.multi_reduction <add>, %37, %cst_19 [1] : vector<128x128xf32> to vector<128xf32>
    %39 = vector.shape_cast %38 : vector<128xf32> to vector<128x1xf32>
    %40 = arith.mulf %37, %37 : vector<128x128xf32>
    %cst_20 = arith.constant dense<0.000000e+00> : vector<128xf32>
    %41 = vector.multi_reduction <add>, %40, %cst_20 [1] : vector<128x128xf32> to vector<128xf32>
    %42 = vector.shape_cast %41 : vector<128xf32> to vector<128x1xf32>
    %cst_21 = arith.constant 7.812500e-03 : f32
    %43 = vector.broadcast %cst_21 : f32 to vector<128x1xf32>
    %44 = arith.mulf %39, %43 : vector<128x1xf32>
    %cst_22 = arith.constant 7.812500e-03 : f32
    %45 = vector.broadcast %cst_22 : f32 to vector<128x1xf32>
    %46 = arith.mulf %42, %45 : vector<128x1xf32>
    %47 = arith.mulf %44, %44 : vector<128x1xf32>
    %48 = arith.subf %46, %47 : vector<128x1xf32>
    %cst_23 = arith.constant 9.99999971E-10 : f32
    %49 = vector.broadcast %cst_23 : f32 to vector<128x1xf32>
    %50 = arith.addf %48, %49 : vector<128x1xf32>
    %51 = math.rsqrt %50 : vector<128x1xf32>
    %52 = vector.broadcast %29 : vector<1x128xf32> to vector<128x128xf32>
    %53 = vector.broadcast %51 : vector<128x1xf32> to vector<128x128xf32>
    %54 = arith.mulf %52, %53 : vector<128x128xf32>
    %55 = vector.broadcast %44 : vector<128x1xf32> to vector<128x128xf32>
    %56 = arith.subf %37, %55 : vector<128x128xf32>
    %57 = arith.mulf %56, %54 : vector<128x128xf32>
    %58 = vector.broadcast %30 : vector<1x128xf32> to vector<128x128xf32>
    %59 = arith.addf %57, %58 : vector<128x128xf32>
    %c0_24 = arith.constant 0 : index
    %c0_25 = arith.constant 0 : index
    %60 = vector.load %arg6[%c0_24, %c0_25] : memref<128x128xf32, #tpu.memory_space<vmem>>, vector<128x128xf32>
    tpu.vector_store %arg6[%c0_24, %c0_25], %59 {strides = array<i32>} : memref<128x128xf32, #tpu.memory_space<vmem>>, vector<128x128xf32>,
    return
  }
  func.func @transform_0(%arg0: i32, %arg1: i32) -> (i32, i32) {
    %c0_i32 = arith.constant 0 : i32
    %0 = arith.cmpi eq, %arg0, %c0_i32 : i32
    %c0_i32_0 = arith.constant 0 : i32
    %1 = arith.select %0, %c0_i32_0, %arg1 : i32
    %c0_i32_1 = arith.constant 0 : i32
    %c0_i32_2 = arith.constant 0 : i32
    return %1, %c0_i32_1 : i32, i32
  }
  func.func @transform_1(%arg0: i32, %arg1: i32) -> (i32, i32) {
    %c0_i32 = arith.constant 0 : i32
    %0 = arith.cmpi eq, %arg0, %c0_i32 : i32
    %c1_i32 = arith.constant 1 : i32
    %1 = arith.select %0, %arg1, %c1_i32 : i32
    %c0_i32_0 = arith.constant 0 : i32
    %c0_i32_1 = arith.constant 0 : i32
    return %1, %c0_i32_0 : i32, i32
  }
  func.func @transform_2(%arg0: i32, %arg1: i32) -> (i32, i32, i32) {
    %c0_i32 = arith.constant 0 : i32
    %c0_i32_0 = arith.constant 0 : i32
    %c0_i32_1 = arith.constant 0 : i32
    return %arg0, %c0_i32, %c0_i32_0 : i32, i32, i32
  }
  func.func @transform_3(%arg0: i32, %arg1: i32) -> (i32, i32, i32) {
    %c0_i32 = arith.constant 0 : i32
    %c0_i32_0 = arith.constant 0 : i32
    %c0_i32_1 = arith.constant 0 : i32
    return %arg0, %c0_i32, %c0_i32_0 : i32, i32, i32
  }
  func.func @transform_4(%arg0: i32, %arg1: i32) -> (i32, i32) {
    %c0_i32 = arith.constant 0 : i32
    return %arg1, %arg0 : i32, i32
  }
}

</mosaic_0001>

<llo_original>
// kernel: hoa_forward.1
$region0: #{hoa_forward.1}
  #allocation0 [shape = 'u32[]', space=smem, size = 0x4, offset = 0x4, fixed_abs, tag = 'smem constant byte address 0x4 - core index']
  #allocation1 [shape = 'u32[144,128]{1,0:T(1,128)}', space=vmem, size = 0x12000, scoped, tag = 'internal scratch']
  #allocation2 [shape = 'bf16[2,256,128]{2,1,0:T(16,128)(2,1)}', space=vmem, size = 0x20000, scoped, tag = 'scratch operand']
  #allocation3 [shape = 'bf16[128,128]{1,0:T(16,128)(2,1)}', space=vmem, size = 0x8000, scoped, tag = 'scratch operand']
  %s0 = inlined_call_operand.vmem [shape: bf16[256,256], index: 0, kind: input, shape index: {}]
  %s1 = inlined_call_operand.vmem [shape: bf16[256,128], index: 1, kind: input, shape index: {}]
  %s2 = inlined_call_operand.vmem [shape: bf16[3,128,128], index: 2, kind: input, shape index: {}]
  %s3 = inlined_call_operand.vmem [shape: f32[3,3,128], index: 3, kind: input, shape index: {}]
  %s4 = inlined_call_operand.hbm [shape: f32[256,384], index: 4, kind: output, shape index: {}]
  %s5 = sld [smem:[#allocation0]]
  $region69: #{hoa_forward.1} parent=0
    _
  %s7 = ssub.s32 1, %s5
  %s8 = scalar_select 0, %s7, %s5
  $region1: #{hoa_forward.1} parent=0
    #allocation4 [shape = 'u8[131072]{0}', space=vmem, size = 0x20000, scoped, tag = 'output window, operand 0']
    #allocation5 [shape = 's32[2]{0}', space=sflag, size = 0x8, scoped, tag = 'scoped memory for hoa_forward.1']
    %9 = vsyncpa [#allocation5], 0
    %s10 = scalar_lea.sflag [#allocation5], 1
    %11 = vsyncpa %s10, 0
    loop: start=0, step=1, limit=8
    $region2: #{hoa_forward.1} parent=1 // loop_pre_header
      _
    $region3: #{hoa_forward.1} parent=1 // loop_header
      %s13 = sphi 0, %s17
      %p14 = scmp.ge.s32.totalorder %s13, 8
      %s20 = sphi 0, %s32
      %s21 = sphi 0, %s28
      %s22 = sphi 0, %s20
      %s23 = sphi 0, %s21
      %s24 = sphi 0, %s22
      %s25 = sphi 0, %s23
      %s39 = sphi 0, %s41
      %s42 = sphi 0, %s39
      %s43 = sphi 0, %s42
      %s59 = sphi 0, %s43
      %s69 = sphi 0, %s71
      %s72 = sphi 0, %s69
      %s73 = sphi 0, %s72
      %s89 = sphi 0, %s73
      %s95 = sphi 0, %s97
      %s98 = sphi 0, %s95
      %s99 = sphi 0, %s98
      %s115 = sphi 0, %s99
      %s121 = sphi 0, %s123
      %s124 = sphi 0, %s121
      %s125 = sphi 0, %s124
      %s141 = sphi 0, %s125
      %s149 = sphi 0, %s151
      %s152 = sphi 0, %s149
      %s153 = sphi 0, %s152
      %s169 = sphi 0, %s153
    $region4: #{hoa_forward.1} parent=1 // loop_header_branch
      %16 = sbr.rel (%p14) target = $region8
    $region5: #{hoa_forward.1} parent=1 // loop_body
      %s18 = ssub.s32 %s13, 1
      %s19 = ssub.s32 %s13, 2
      %s26 = sadd.s32 1, %s21
      %p27 = scmp.ge.s32.totalorder %s26, 2
      %s28 = scalar_select %p27, 0, %s26
      %s29 = sadd.s32 1, %s20
      %s30 = scalar_select %p27, %s29, %s20
      %p31 = scmp.ge.s32.totalorder %s30, 3
      %s32 = scalar_select %p31, 0, %s30
      %p33 = scmp.eq.s32.totalorder %s20, 0
      %s34 = scalar_select %p33, 0, %s21
      %p35 = scmp.eq.s32.totalorder %s32, 0
      %s36 = scalar_select %p35, 0, %s28
      %s37 = ssub.s32 %s34, %s36
      %p38 = scmp.eq.s32.totalorder %s37, 0
      %s40 = sadd.s32 %s39, 1
      %s41 = scalar_select %p38, %s39, %s40
      %p44 = pneg %p38
      %p45 = scmp.eq.s32.totalorder %s13, 5
      %p46 = por %p44, %p45
      %p47 = scmp.ne.s32.totalorder %s39, %s42
      %p48 = scmp.eq.s32.totalorder %s13, 0
      %p49 = por %p47, %p48
      %p50 = scmp.ne.s32.totalorder %s39, %s42
      %p51 = scmp.eq.s32.totalorder %s18, 5
      %p52 = por %p50, %p51
      %p53 = scmp.ne.s32.totalorder %s42, %s43
      %p54 = scmp.eq.s32.totalorder %s18, 0
      %p55 = por %p53, %p54
      %p56 = scmp.ne.s32.totalorder %s42, %s43
      %p57 = scmp.eq.s32.totalorder %s19, 5
      %p58 = por %p56, %p57
      %p60 = scmp.ne.s32.totalorder %s43, %s59
      %p61 = scmp.eq.s32.totalorder %s19, 0
      %p62 = por %p60, %p61
      %p63 = scmp.eq.s32.totalorder %s20, 0
      %s64 = scalar_select %p63, %s21, 1
      %p65 = scmp.eq.s32.totalorder %s32, 0
      %s66 = scalar_select %p65, %s28, 1
      %s67 = ssub.s32 %s64, %s66
      %p68 = scmp.eq.s32.totalorder %s67, 0
      %s70 = sadd.s32 %s69, 1
      %s71 = scalar_select %p68, %s69, %s70
      %p74 = pneg %p68
      %p75 = scmp.eq.s32.totalorder %s13, 5
      %p76 = por %p74, %p75
      %p77 = scmp.ne.s32.totalorder %s69, %s72
      %p78 = scmp.eq.s32.totalorder %s13, 0
      %p79 = por %p77, %p78
      %p80 = scmp.ne.s32.totalorder %s69, %s72
      %p81 = scmp.eq.s32.totalorder %s18, 5
      %p82 = por %p80, %p81
      %p83 = scmp.ne.s32.totalorder %s72, %s73
      %p84 = scmp.eq.s32.totalorder %s18, 0
      %p85 = por %p83, %p84
      %p86 = scmp.ne.s32.totalorder %s72, %s73
      %p87 = scmp.eq.s32.totalorder %s19, 5
      %p88 = por %p86, %p87
      %p90 = scmp.ne.s32.totalorder %s73, %s89
      %p91 = scmp.eq.s32.totalorder %s19, 0
      %p92 = por %p90, %p91
      %s93 = ssub.s32 %s20, %s32
      %p94 = scmp.eq.s32.totalorder %s93, 0
      %s96 = sadd.s32 %s95, 1
      %s97 = scalar_select %p94, %s95, %s96
      %p100 = pneg %p94
      %p101 = scmp.eq.s32.totalorder %s13, 5
      %p102 = por %p100, %p101
      %p103 = scmp.ne.s32.totalorder %s95, %s98
      %p104 = scmp.eq.s32.totalorder %s13, 0
      %p105 = por %p103, %p104
      %p106 = scmp.ne.s32.totalorder %s95, %s98
      %p107 = scmp.eq.s32.totalorder %s18, 5
      %p108 = por %p106, %p107
      %p109 = scmp.ne.s32.totalorder %s98, %s99
      %p110 = scmp.eq.s32.totalorder %s18, 0
      %p111 = por %p109, %p110
      %p112 = scmp.ne.s32.totalorder %s98, %s99
      %p113 = scmp.eq.s32.totalorder %s19, 5
      %p114 = por %p112, %p113
      %p116 = scmp.ne.s32.totalorder %s99, %s115
      %p117 = scmp.eq.s32.totalorder %s19, 0
      %p118 = por %p116, %p117
      %s119 = ssub.s32 %s20, %s32
      %p120 = scmp.eq.s32.totalorder %s119, 0
      %s122 = sadd.s32 %s121, 1
      %s123 = scalar_select %p120, %s121, %s122
      %p126 = pneg %p120
      %p127 = scmp.eq.s32.totalorder %s13, 5
      %p128 = por %p126, %p127
      %p129 = scmp.ne.s32.totalorder %s121, %s124
      %p130 = scmp.eq.s32.totalorder %s13, 0
      %p131 = por %p129, %p130
      %p132 = scmp.ne.s32.totalorder %s121, %s124
      %p133 = scmp.eq.s32.totalorder %s18, 5
      %p134 = por %p132, %p133
      %p135 = scmp.ne.s32.totalorder %s124, %s125
      %p136 = scmp.eq.s32.totalorder %s18, 0
      %p137 = por %p135, %p136
      %p138 = scmp.ne.s32.totalorder %s124, %s125
      %p139 = scmp.eq.s32.totalorder %s19, 5
      %p140 = por %p138, %p139
      %p142 = scmp.ne.s32.totalorder %s125, %s141
      %p143 = scmp.eq.s32.totalorder %s19, 0
      %p144 = por %p142, %p143
      %s145 = ssub.s32 %s21, %s28
      %s146 = ssub.s32 %s20, %s32
      %s147 = sor.u32 %s145, %s146
      %p148 = scmp.eq.s32.totalorder %s147, 0
      %s150 = sadd.s32 %s149, 1
      %s151 = scalar_select %p148, %s149, %s150
      %p154 = pneg %p148
      %p155 = scmp.eq.s32.totalorder %s13, 5
      %p156 = por %p154, %p155
      %p157 = scmp.ne.s32.totalorder %s149, %s152
      %p158 = scmp.eq.s32.totalorder %s13, 0
      %p159 = por %p157, %p158
      %p160 = scmp.ne.s32.totalorder %s149, %s152
      %p161 = scmp.eq.s32.totalorder %s18, 5
      %p162 = por %p160, %p161
      %p163 = scmp.ne.s32.totalorder %s152, %s153
      %p164 = scmp.eq.s32.totalorder %s18, 0
      %p165 = por %p163, %p164
      %p166 = scmp.ne.s32.totalorder %s152, %s153
      %p167 = scmp.eq.s32.totalorder %s19, 5
      %p168 = por %p166, %p167
      %p170 = scmp.ne.s32.totalorder %s153, %s169
      %p171 = scmp.eq.s32.totalorder %s19, 0
      %p172 = por %p170, %p171
      %p173 = scmp.le.s32.totalorder 1, %s13
      %p174 = scmp.lt.s32.totalorder %s13, 7
      %p175 = pnand %p173, %p174
      %p176 = pneg %p175
      // Predicated region
      $region9: #{hoa_forward.1} parent=5 // pred_check
        _
      $region10: #{hoa_forward.1} parent=5 // pred_check_branch
        %178 = sbr.rel (%p175) target = $region12
      $region11: #{hoa_forward.1} parent=5 // pred_region
        %s179 = ssub.s32 %s13, 1
      $region12: #{hoa_forward.1} parent=5 // pred_fallthru
        _
      %p180 = scmp.lt.s32.totalorder %s13, 6
      // Predicated region
      $region13: #{hoa_forward.1} parent=5 // pred_check
        %p181 = pneg %p180
      $region14: #{hoa_forward.1} parent=5 // pred_check_branch
        %183 = sbr.rel (%p181) target = $region16
      $region15: #{hoa_forward.1} parent=5 // pred_region
        // Predicated region
        $region17: #{hoa_forward.1} parent=15 // pred_check
          %p184 = pneg %p49
        $region18: #{hoa_forward.1} parent=15 // pred_check_branch
          %186 = sbr.rel (%p184) target = $region20
        $region19: #{hoa_forward.1} parent=15 // pred_region
          %p187 = scmp.eq.s32.totalorder %s20, 0
          %s188 = scalar_select %p187, 0, %s21
          %s189 = smul.u32 16, %s188
          %p190 = scmp.lt.s32.totalorder %s189, 31
          %s191 = scalar_select %p190, %s189, 31
          %s192 = smul.addr %s191, 2
          %s193 = smul.addr %s192, 4
          %s194 = scalar_lea.vmem %s0, %s193
          %p195 = scmp.eq.s32.totalorder %s20, 0
          %s196 = scalar_select %p195, 0, %s21
          %s197 = smul.u32 16, %s196
        $region20: #{hoa_forward.1} parent=15 // pred_fallthru
          _
        // Predicated region
        $region21: #{hoa_forward.1} parent=15 // pred_check
          %p198 = pneg %p79
        $region22: #{hoa_forward.1} parent=15 // pred_check_branch
          %200 = sbr.rel (%p198) target = $region24
        $region23: #{hoa_forward.1} parent=15 // pred_region
          %p201 = scmp.eq.s32.totalorder %s20, 0
          %s202 = scalar_select %p201, %s21, 1
          %s203 = smul.u32 16, %s202
          %p204 = scmp.lt.s32.totalorder %s203, 31
          %s205 = scalar_select %p204, %s203, 31
          %s206 = smul.addr %s205, 4
          %s207 = scalar_lea.vmem %s1, %s206
          %p208 = scmp.eq.s32.totalorder %s20, 0
          %s209 = scalar_select %p208, %s21, 1
          %s210 = smul.u32 16, %s209
        $region24: #{hoa_forward.1} parent=15 // pred_fallthru
          _
        // Predicated region
        $region25: #{hoa_forward.1} parent=15 // pred_check
          %p211 = pneg %p105
        $region26: #{hoa_forward.1} parent=15 // pred_check_branch
          %213 = sbr.rel (%p211) target = $region28
        $region27: #{hoa_forward.1} parent=15 // pred_region
          %p214 = scmp.lt.s32.totalorder %s20, 2
          %s215 = scalar_select %p214, %s20, 2
          %s216 = smul.addr %s215, 16
          %s217 = smul.addr %s216, 4
          %s218 = scalar_lea.vmem %s2, %s217
        $region28: #{hoa_forward.1} parent=15 // pred_fallthru
          _
        // Predicated region
        $region29: #{hoa_forward.1} parent=15 // pred_check
          %p219 = pneg %p131
        $region30: #{hoa_forward.1} parent=15 // pred_check_branch
          %221 = sbr.rel (%p219) target = $region32
        $region31: #{hoa_forward.1} parent=15 // pred_region
          %p222 = scmp.lt.s32.totalorder %s20, 2
          %s223 = scalar_select %p222, %s20, 2
          %s224 = smul.addr %s223, 4
          %s225 = scalar_lea.vmem %s3, %s224
        $region32: #{hoa_forward.1} parent=15 // pred_fallthru
          _
      $region16: #{hoa_forward.1} parent=5 // pred_fallthru
        _
      %p226 = scmp.le.s32.totalorder 1, %s13
      %p227 = scmp.lt.s32.totalorder %s13, 7
      %p228 = pnand %p226, %p227
      %p229 = pneg %p228
      // Predicated region
      $region33: #{hoa_forward.1} parent=5 // pred_check
        _
      $region34: #{hoa_forward.1} parent=5 // pred_check_branch
        %231 = sbr.rel (%p228) target = $region36
      $region35: #{hoa_forward.1} parent=5 // pred_region
        %s232 = ssub.s32 %s13, 1
        %p233 = scmp.eq.s32.totalorder %s22, 0
        %s234 = scalar_select %p233, 0, %s23
        %s235 = smul.u32 16, %s234
        %p236 = scmp.lt.s32.totalorder %s235, 31
        %s237 = scalar_select %p236, %s235, 31
        %s238 = smul.addr %s237, 2
        %s239 = smul.addr %s238, 4
        %s240 = scalar_lea.vmem %s0, %s239
        %p241 = pneg %p55
        %p242 = pneg %p52
        %p243 = scmp.eq.s32.totalorder %s22, 0
        %s244 = scalar_select %p243, %s23, 1
        %s245 = smul.u32 16, %s244
        %p246 = scmp.lt.s32.totalorder %s245, 31
        %s247 = scalar_select %p246, %s245, 31
        %s248 = smul.addr %s247, 4
        %s249 = scalar_lea.vmem %s1, %s248
        %p250 = pneg %p85
        %p251 = pneg %p82
        %p252 = scmp.lt.s32.totalorder %s22, 2
        %s253 = scalar_select %p252, %s22, 2
        %s254 = smul.addr %s253, 16
        %s255 = smul.addr %s254, 4
        %s256 = scalar_lea.vmem %s2, %s255
        %p257 = pneg %p111
        %p258 = pneg %p108
        %p259 = scmp.lt.s32.totalorder %s22, 2
        %s260 = scalar_select %p259, %s22, 2
        %s261 = smul.addr %s260, 4
        %s262 = scalar_lea.vmem %s3, %s261
        %p263 = pneg %p137
        %p264 = pneg %p134
        %p265 = pneg %p165
        %p266 = pneg %p162
        %s267 = sand.u32 %s152, 1
        %s268 = scalar_lea.sflag [#allocation5], %s267
        %s269 = sand.u32 %s152, 1
        %s270 = smul.addr %s269, 128
        %s271 = scalar_lea.vmem [#allocation4], %s270
        %p272 = scmp.eq.s32.totalorder %s22, 0
        %s273 = scalar_select %p272, 0, %s23
        %s274 = smul.u32 16, %s273
        %p275 = scmp.lt.s32.totalorder %s274, 31
        %s276 = scalar_select %p275, %s274, 31
        %s277 = smul.addr %s276, 2
        %s278 = smul.addr %s277, 4
        %s279 = scalar_lea.vmem %s0, %s278
        %p280 = scmp.eq.s32.totalorder %s22, 0
        %s281 = scalar_select %p280, 0, %s23
        %s282 = smul.u32 16, %s281
        %p283 = scmp.eq.s32.totalorder %s22, 0
        %s284 = scalar_select %p283, %s23, 1
        %s285 = smul.u32 16, %s284
        %p286 = scmp.lt.s32.totalorder %s285, 31
        %s287 = scalar_select %p286, %s285, 31
        %s288 = smul.addr %s287, 4
        %s289 = scalar_lea.vmem %s1, %s288
        %p290 = scmp.eq.s32.totalorder %s22, 0
        %s291 = scalar_select %p290, %s23, 1
        %s292 = smul.u32 16, %s291
        %p293 = scmp.lt.s32.totalorder %s22, 2
        %s294 = scalar_select %p293, %s22, 2
        %s295 = smul.addr %s294, 16
        %s296 = smul.addr %s295, 4
        %s297 = scalar_lea.vmem %s2, %s296
        %p298 = scmp.lt.s32.totalorder %s22, 2
        %s299 = scalar_select %p298, %s22, 2
        %s300 = smul.addr %s299, 4
        %s301 = scalar_lea.vmem %s3, %s300
        %s302 = smul.u32 16, %s23
        %s304 = smul.u32 %s23, 128
        %p305 = scmp.lt.s32.totalorder %s22, 0
        %s306 = ssub.s32 0, %s22
        %s307 = scalar_select %p305, %s306, %s22
        %s308 = sand.u32 %s307, 1
        %s309 = ssub.s32 0, %s308
        %s310 = scalar_select %p305, %s309, %s308
        %p311 = scmp.ne.s32.totalorder %s310, 0
        %p312 = scmp.lt.s32.totalorder %s310, 0
        %p313 = pnand %p312, %p311
        %p314 = pneg %p313
        %s315 = sadd.s32 %s310, 2
        %s316 = scalar_select %p314, %s315, %s310
        %p317 = scmp.eq.s32.totalorder %s22, 0
        // Predicated region
        $region37: #{hoa_forward.1} parent=35 // pred_check
          %p318 = pneg %p317
        $region38: #{hoa_forward.1} parent=35 // pred_check_branch
          %320 = sbr.rel (%p318) target = $region40
        $region39: #{hoa_forward.1} parent=35 // pred_region
          %v321 = vld [vmem:[%s289] sm:$0xf]
          %v322 = vld [vmem:[%s289 + $0x4] sm:$0xf]
          %v323 = vld [vmem:[%s289 + $0x8] sm:$0xf]
          %v324 = vld [vmem:[%s289 + $0xc] sm:$0xf]
          %v325 = vld [vmem:[%s289 + $0x10] sm:$0xf]
          %v326 = vld [vmem:[%s289 + $0x14] sm:$0xf]
          %v327 = vld [vmem:[%s289 + $0x18] sm:$0xf]
          %v328 = vld [vmem:[%s289 + $0x1c] sm:$0xf]
          %v329 = vld [vmem:[%s289 + $0x20] sm:$0xf]
          %v330 = vld [vmem:[%s289 + $0x24] sm:$0xf]
          %v331 = vld [vmem:[%s289 + $0x28] sm:$0xf]
          %v332 = vld [vmem:[%s289 + $0x2c] sm:$0xf]
          %v333 = vld [vmem:[%s289 + $0x30] sm:$0xf]
          %v334 = vld [vmem:[%s289 + $0x34] sm:$0xf]
          %v335 = vld [vmem:[%s289 + $0x38] sm:$0xf]
          %v336 = vld [vmem:[%s289 + $0x3c] sm:$0xf]
          %v353 = vunpack.c.l.b16 %v321
          %v354 = vunpack.c.l.b16 %v322
          %v355 = vunpack.c.l.b16 %v323
          %v356 = vunpack.c.l.b16 %v324
          %v357 = vunpack.c.l.b16 %v325
          %v358 = vunpack.c.l.b16 %v326
          %v359 = vunpack.c.l.b16 %v327
          %v360 = vunpack.c.l.b16 %v328
          %v361 = vunpack.c.l.b16 %v329
          %v362 = vunpack.c.l.b16 %v330
          %v363 = vunpack.c.l.b16 %v331
          %v364 = vunpack.c.l.b16 %v332
          %v365 = vunpack.c.l.b16 %v333
          %v366 = vunpack.c.l.b16 %v334
          %v367 = vunpack.c.l.b16 %v335
          %v368 = vunpack.c.l.b16 %v336
          %v369 = vpack.c.b16 %v354, %v353
          %v370 = vpack.c.b16 %v356, %v355
          %v371 = vpack.c.b16 %v358, %v357
          %v372 = vpack.c.b16 %v360, %v359
          %v373 = vpack.c.b16 %v362, %v361
          %v374 = vpack.c.b16 %v364, %v363
          %v375 = vpack.c.b16 %v366, %v365
          %v376 = vpack.c.b16 %v368, %v367
          %385 = vst [vmem:[#allocation3] sm:$0xff] %v369
          %386 = vst [vmem:[#allocation3 + $0x8] sm:$0xff] %v370
          %387 = vst [vmem:[#allocation3 + $0x10] sm:$0xff] %v371
          %388 = vst [vmem:[#allocation3 + $0x18] sm:$0xff] %v372
          %389 = vst [vmem:[#allocation3 + $0x20] sm:$0xff] %v373
          %390 = vst [vmem:[#allocation3 + $0x28] sm:$0xff] %v374
          %391 = vst [vmem:[#allocation3 + $0x30] sm:$0xff] %v375
          %392 = vst [vmem:[#allocation3 + $0x38] sm:$0xff] %v376
          %s393 = sshra.s32 %s304, 4
          %s394 = sand.u32 %s304, 15
          %s395 = smul.addr %s393, 8
          %s396 = scalar_lea.vmem [#allocation2], %s395
          %397 = vst [vmem:[%s396] sm:$0xff] %v369
          %398 = vst [vmem:[%s396 + $0x8] sm:$0xff] %v370
          %399 = vst [vmem:[%s396 + $0x10] sm:$0xff] %v371
          %400 = vst [vmem:[%s396 + $0x18] sm:$0xff] %v372
          %401 = vst [vmem:[%s396 + $0x20] sm:$0xff] %v373
          %402 = vst [vmem:[%s396 + $0x28] sm:$0xff] %v374
          %403 = vst [vmem:[%s396 + $0x30] sm:$0xff] %v375
          %404 = vst [vmem:[%s396 + $0x38] sm:$0xff] %v376
        $region40: #{hoa_forward.1} parent=35 // pred_fallthru
          _
        %p405 = scmp.gt.s32.totalorder %s22, 0
        %p406 = scmp.eq.s32.totalorder %s316, 1
        %p407 = pnand %p405, %p406
        %p408 = pneg %p407
        // Predicated region
        $region41: #{hoa_forward.1} parent=35 // pred_check
          _
        $region42: #{hoa_forward.1} parent=35 // pred_check_branch
          %410 = sbr.rel (%p407) target = $region44
        $region43: #{hoa_forward.1} parent=35 // pred_region
          %v411 = vld [vmem:[%s279] sm:$0xff]
          %v412 = vld [vmem:[%s279 + $0x8] sm:$0xff]
          %v413 = vld [vmem:[%s279 + $0x10] sm:$0xff]
          %v414 = vld [vmem:[%s279 + $0x18] sm:$0xff]
          %v415 = vld [vmem:[%s279 + $0x20] sm:$0xff]
          %v416 = vld [vmem:[%s279 + $0x28] sm:$0xff]
          %v417 = vld [vmem:[%s279 + $0x30] sm:$0xff]
          %v418 = vld [vmem:[%s279 + $0x38] sm:$0xff]
          %v419 = vld [vmem:[%s279 + $0x40] sm:$0xff]
          %v420 = vld [vmem:[%s279 + $0x48] sm:$0xff]
          %v421 = vld [vmem:[%s279 + $0x50] sm:$0xff]
          %v422 = vld [vmem:[%s279 + $0x58] sm:$0xff]
          %v423 = vld [vmem:[%s279 + $0x60] sm:$0xff]
          %v424 = vld [vmem:[%s279 + $0x68] sm:$0xff]
          %v425 = vld [vmem:[%s279 + $0x70] sm:$0xff]
          %v426 = vld [vmem:[%s279 + $0x78] sm:$0xff]
          %v427 = vld [vmem:[#allocation2] sm:$0xff]
          %v428 = vld [vmem:[#allocation2 + $0x8] sm:$0xff]
          %v429 = vld [vmem:[#allocation2 + $0x10] sm:$0xff]
          %v430 = vld [vmem:[#allocation2 + $0x18] sm:$0xff]
          %v431 = vld [vmem:[#allocation2 + $0x20] sm:$0xff]
          %v432 = vld [vmem:[#allocation2 + $0x28] sm:$0xff]
          %v433 = vld [vmem:[#allocation2 + $0x30] sm:$0xff]
          %v434 = vld [vmem:[#allocation2 + $0x38] sm:$0xff]
          %v435 = vld [vmem:[#allocation2 + $0x40] sm:$0xff]
          %v436 = vld [vmem:[#allocation2 + $0x48] sm:$0xff]
          %v437 = vld [vmem:[#allocation2 + $0x50] sm:$0xff]
          %v438 = vld [vmem:[#allocation2 + $0x58] sm:$0xff]
          %v439 = vld [vmem:[#allocation2 + $0x60] sm:$0xff]
          %v440 = vld [vmem:[#allocation2 + $0x68] sm:$0xff]
          %v441 = vld [vmem:[#allocation2 + $0x70] sm:$0xff]
          %v442 = vld [vmem:[#allocation2 + $0x78] sm:$0xff]
          %v459 = vunpack.c.l.b16 %v411
          %v460 = vunpack.c.h.b16 %v411
          %v461 = vunpack.c.l.b16 %v412
          %v462 = vunpack.c.h.b16 %v412
          %v463 = vunpack.c.l.b16 %v413
          %v464 = vunpack.c.h.b16 %v413
          %v465 = vunpack.c.l.b16 %v414
          %v466 = vunpack.c.h.b16 %v414
          %v467 = vunpack.c.l.b16 %v415
          %v468 = vunpack.c.h.b16 %v415
          %v469 = vunpack.c.l.b16 %v416
          %v470 = vunpack.c.h.b16 %v416
          %v471 = vunpack.c.l.b16 %v417
          %v472 = vunpack.c.h.b16 %v417
          %v473 = vunpack.c.l.b16 %v418
          %v474 = vunpack.c.h.b16 %v418
          %v475 = vunpack.c.l.b16 %v419
          %v476 = vunpack.c.h.b16 %v419
          %v477 = vunpack.c.l.b16 %v420
          %v478 = vunpack.c.h.b16 %v420
          %v479 = vunpack.c.l.b16 %v421
          %v480 = vunpack.c.h.b16 %v421
          %v481 = vunpack.c.l.b16 %v422
          %v482 = vunpack.c.h.b16 %v422
          %v483 = vunpack.c.l.b16 %v423
          %v484 = vunpack.c.h.b16 %v423
          %v485 = vunpack.c.l.b16 %v424
          %v486 = vunpack.c.h.b16 %v424
          %v487 = vunpack.c.l.b16 %v425
          %v488 = vunpack.c.h.b16 %v425
          %v489 = vunpack.c.l.b16 %v426
          %v490 = vunpack.c.h.b16 %v426
          %v491 = vpack.c.b16 %v461, %v459
          %v492 = vpack.c.b16 %v462, %v460
          %v493 = vpack.c.b16 %v465, %v463
          %v494 = vpack.c.b16 %v466, %v464
          %v495 = vpack.c.b16 %v469, %v467
          %v496 = vpack.c.b16 %v470, %v468
          %v497 = vpack.c.b16 %v473, %v471
          %v498 = vpack.c.b16 %v474, %v472
          %v499 = vpack.c.b16 %v477, %v475
          %v500 = vpack.c.b16 %v478, %v476
          %v501 = vpack.c.b16 %v481, %v479
          %v502 = vpack.c.b16 %v482, %v480
          %v503 = vpack.c.b16 %v485, %v483
          %v504 = vpack.c.b16 %v486, %v484
          %v505 = vpack.c.b16 %v489, %v487
          %v506 = vpack.c.b16 %v490, %v488
          %523 = vmatprep.subr.bf16.mxu0 0
          %524 = vmatpush1.bf16.msra.mxu0 %v427
          %525 = vmatprep.subr.bf16.mxu0 0
          %526 = vmatpush1.bf16.msra.mxu0 %v428
          %527 = vmatprep.subr.bf16.mxu0 0
          %528 = vmatpush1.bf16.msra.mxu0 %v429
          %529 = vmatprep.subr.bf16.mxu0 0
          %530 = vmatpush1.bf16.msra.mxu0 %v430
          %531 = vmatprep.subr.bf16.mxu0 0
          %532 = vmatpush1.bf16.msra.mxu0 %v431
          %533 = vmatprep.subr.bf16.mxu0 0
          %534 = vmatpush1.bf16.msra.mxu0 %v432
          %535 = vmatprep.subr.bf16.mxu0 0
          %536 = vmatpush1.bf16.msra.mxu0 %v433
          %537 = vmatprep.subr.bf16.mxu0 0
          %538 = vmatpush1.bf16.msra.mxu0 %v434
          %539 = vmatprep.subr.bf16.mxu0 0
          %540 = vmatpush1.bf16.msra.mxu0 %v435
          %541 = vmatprep.subr.bf16.mxu0 0
          %542 = vmatpush1.bf16.msra.mxu0 %v436
          %543 = vmatprep.subr.bf16.mxu0 0
          %544 = vmatpush1.bf16.msra.mxu0 %v437
          %545 = vmatprep.subr.bf16.mxu0 0
          %546 = vmatpush1.bf16.msra.mxu0 %v438
          %547 = vmatprep.subr.bf16.mxu0 0
          %548 = vmatpush1.bf16.msra.mxu0 %v439
          %549 = vmatprep.subr.bf16.mxu0 0
          %550 = vmatpush1.bf16.msra.mxu0 %v440
          %551 = vmatprep.subr.bf16.mxu0 0
          %552 = vmatpush1.bf16.msra.mxu0 %v441
          %553 = vmatprep.subr.bf16.mxu0 0
          %554 = vmatpush1.bf16.msra.mxu0 %v442
          %555 = vmatprep.mubr.bf16.mxu0 %v492
          %556 = vmatmul.mubr.bf16.gmra.mrb[0].mxu0 %v491
          %v557 = vpop.f32.mrb[0].mxu0
          %v558 = vadd.f32 0.0, %v557
          %v559 = vpop.f32.mrb[0].mxu0
          %v560 = vpop.f32.mrb[0].mxu0
          %v561 = vadd.f32 0.0, %v560
          %v562 = vpop.f32.mrb[0].mxu0
          %563 = vmatprep.mubr.bf16.mxu0 %v494
          %564 = vmatmul.mubr.bf16.gmra.mrb[0].mxu0 %v493
          %v565 = vpop.f32.mrb[0].mxu0
          %v566 = vadd.f32 0.0, %v565
          %v567 = vpop.f32.mrb[0].mxu0
          %v568 = vpop.f32.mrb[0].mxu0
          %v569 = vadd.f32 0.0, %v568
          %v570 = vpop.f32.mrb[0].mxu0
          %571 = vmatprep.mubr.bf16.mxu0 %v496
          %572 = vmatmul.mubr.bf16.gmra.mrb[0].mxu0 %v495
          %v573 = vpop.f32.mrb[0].mxu0
          %v574 = vadd.f32 0.0, %v573
          %v575 = vpop.f32.mrb[0].mxu0
          %v576 = vpop.f32.mrb[0].mxu0
          %v577 = vadd.f32 0.0, %v576
          %v578 = vpop.f32.mrb[0].mxu0
          %579 = vmatprep.mubr.bf16.mxu0 %v498
          %580 = vmatmul.mubr.bf16.gmra.mrb[0].mxu0 %v497
          %v581 = vpop.f32.mrb[0].mxu0
          %v582 = vadd.f32 0.0, %v581
          %v583 = vpop.f32.mrb[0].mxu0
          %v584 = vpop.f32.mrb[0].mxu0
          %v585 = vadd.f32 0.0, %v584
          %v586 = vpop.f32.mrb[0].mxu0
          %587 = vmatprep.mubr.bf16.mxu0 %v500
          %588 = vmatmul.mubr.bf16.gmra.mrb[0].mxu0 %v499
          %v589 = vpop.f32.mrb[0].mxu0
          %v590 = vadd.f32 0.0, %v589
          %v591 = vpop.f32.mrb[0].mxu0
          %v592 = vpop.f32.mrb[0].mxu0
          %v593 = vadd.f32 0.0, %v592
          %v594 = vpop.f32.mrb[0].mxu0
          %595 = vmatprep.mubr.bf16.mxu0 %v502
          %596 = vmatmul.mubr.bf16.gmra.mrb[0].mxu0 %v501
          %v597 = vpop.f32.mrb[0].mxu0
          %v598 = vadd.f32 0.0, %v597
          %v599 = vpop.f32.mrb[0].mxu0
          %v600 = vpop.f32.mrb[0].mxu0
          %v601 = vadd.f32 0.0, %v600
          %v602 = vpop.f32.mrb[0].mxu0
          %603 = vmatprep.mubr.bf16.mxu0 %v504
          %604 = vmatmul.mubr.bf16.gmra.mrb[0].mxu0 %v503
          %v605 = vpop.f32.mrb[0].mxu0
          %v606 = vadd.f32 0.0, %v605
          %v607 = vpop.f32.mrb[0].mxu0
          %v608 = vpop.f32.mrb[0].mxu0
          %v609 = vadd.f32 0.0, %v608
          %v610 = vpop.f32.mrb[0].mxu0
          %611 = vmatprep.mubr.bf16.mxu0 %v506
          %612 = vmatmul.mubr.bf16.gmra.mrb[0].mxu0 %v505
          %v613 = vpop.f32.mrb[0].mxu0
          %v614 = vadd.f32 0.0, %v613
          %v615 = vpop.f32.mrb[0].mxu0
          %v616 = vpop.f32.mrb[0].mxu0
          %v617 = vadd.f32 0.0, %v616
          %v618 = vpop.f32.mrb[0].mxu0
          %619 = vdwg.mxu0
          %v620 = vpack.c.bf16 %v561, %v558
          %v621 = vpack.c.bf16 %v569, %v566
          %v622 = vpack.c.bf16 %v577, %v574
          %v623 = vpack.c.bf16 %v585, %v582
          %v624 = vpack.c.bf16 %v593, %v590
          %v625 = vpack.c.bf16 %v601, %v598
          %v626 = vpack.c.bf16 %v609, %v606
          %v627 = vpack.c.bf16 %v617, %v614
          %628 = vst [vmem:[#allocation3] sm:$0xff] %v620
          %629 = vst [vmem:[#allocation3 + $0x8] sm:$0xff] %v621
          %630 = vst [vmem:[#allocation3 + $0x10] sm:$0xff] %v622
          %631 = vst [vmem:[#allocation3 + $0x18] sm:$0xff] %v623
          %632 = vst [vmem:[#allocation3 + $0x20] sm:$0xff] %v624
          %633 = vst [vmem:[#allocation3 + $0x28] sm:$0xff] %v625
          %634 = vst [vmem:[#allocation3 + $0x30] sm:$0xff] %v626
          %635 = vst [vmem:[#allocation3 + $0x38] sm:$0xff] %v627
          %s636 = sadd.s32 %s22, 1
          %p637 = scmp.lt.s32.totalorder %s636, 3
          // Predicated region
          $region45: #{hoa_forward.1} parent=43 // pred_check
            %p638 = pneg %p637
          $region46: #{hoa_forward.1} parent=43 // pred_check_branch
            %640 = sbr.rel (%p638) target = $region48
          $region47: #{hoa_forward.1} parent=43 // pred_region
            %s641 = sshra.s32 %s304, 4
            %s642 = sand.u32 %s304, 15
            %s643 = sadd.s32 %s641, 16
            %s644 = smul.addr %s643, 8
            %s645 = scalar_lea.vmem [#allocation2], %s644
            %646 = vst [vmem:[%s645] sm:$0xff] %v620
            %647 = vst [vmem:[%s645 + $0x8] sm:$0xff] %v621
            %648 = vst [vmem:[%s645 + $0x10] sm:$0xff] %v622
            %649 = vst [vmem:[%s645 + $0x18] sm:$0xff] %v623
            %650 = vst [vmem:[%s645 + $0x20] sm:$0xff] %v624
            %651 = vst [vmem:[%s645 + $0x28] sm:$0xff] %v625
            %652 = vst [vmem:[%s645 + $0x30] sm:$0xff] %v626
            %653 = vst [vmem:[%s645 + $0x38] sm:$0xff] %v627
          $region48: #{hoa_forward.1} parent=43 // pred_fallthru
            _
        $region44: #{hoa_forward.1} parent=35 // pred_fallthru
          _
        %p654 = scmp.eq.s32.totalorder %s316, 0
        %p655 = pnand %p405, %p654
        %p656 = pneg %p655
        // Predicated region
        $region49: #{hoa_forward.1} parent=35 // pred_check
          _
        $region50: #{hoa_forward.1} parent=35 // pred_check_branch
          %658 = sbr.rel (%p655) target = $region52
        $region51: #{hoa_forward.1} parent=35 // pred_region
          %v659 = vld [vmem:[%s279] sm:$0xff]
          %v660 = vld [vmem:[%s279 + $0x8] sm:$0xff]
          %v661 = vld [vmem:[%s279 + $0x10] sm:$0xff]
          %v662 = vld [vmem:[%s279 + $0x18] sm:$0xff]
          %v663 = vld [vmem:[%s279 + $0x20] sm:$0xff]
          %v664 = vld [vmem:[%s279 + $0x28] sm:$0xff]
          %v665 = vld [vmem:[%s279 + $0x30] sm:$0xff]
          %v666 = vld [vmem:[%s279 + $0x38] sm:$0xff]
          %v667 = vld [vmem:[%s279 + $0x40] sm:$0xff]
          %v668 = vld [vmem:[%s279 + $0x48] sm:$0xff]
          %v669 = vld [vmem:[%s279 + $0x50] sm:$0xff]
          %v670 = vld [vmem:[%s279 + $0x58] sm:$0xff]
          %v671 = vld [vmem:[%s279 + $0x60] sm:$0xff]
          %v672 = vld [vmem:[%s279 + $0x68] sm:$0xff]
          %v673 = vld [vmem:[%s279 + $0x70] sm:$0xff]
          %v674 = vld [vmem:[%s279 + $0x78] sm:$0xff]
          %s675 = scalar_lea.vmem [#allocation2], 128
          %v676 = vld [vmem:[%s675] sm:$0xff]
          %v677 = vld [vmem:[%s675 + $0x8] sm:$0xff]
          %v678 = vld [vmem:[%s675 + $0x10] sm:$0xff]
          %v679 = vld [vmem:[%s675 + $0x18] sm:$0xff]
          %v680 = vld [vmem:[%s675 + $0x20] sm:$0xff]
          %v681 = vld [vmem:[%s675 + $0x28] sm:$0xff]
          %v682 = vld [vmem:[%s675 + $0x30] sm:$0xff]
          %v683 = vld [vmem:[%s675 + $0x38] sm:$0xff]
          %v684 = vld [vmem:[%s675 + $0x40] sm:$0xff]
          %v685 = vld [vmem:[%s675 + $0x48] sm:$0xff]
          %v686 = vld [vmem:[%s675 + $0x50] sm:$0xff]
          %v687 = vld [vmem:[%s675 + $0x58] sm:$0xff]
          %v688 = vld [vmem:[%s675 + $0x60] sm:$0xff]
          %v689 = vld [vmem:[%s675 + $0x68] sm:$0xff]
          %v690 = vld [vmem:[%s675 + $0x70] sm:$0xff]
          %v691 = vld [vmem:[%s675 + $0x78] sm:$0xff]
          %v708 = vunpack.c.l.b16 %v659
          %v709 = vunpack.c.h.b16 %v659
          %v710 = vunpack.c.l.b16 %v660
          %v711 = vunpack.c.h.b16 %v660
          %v712 = vunpack.c.l.b16 %v661
          %v713 = vunpack.c.h.b16 %v661
          %v714 = vunpack.c.l.b16 %v662
          %v715 = vunpack.c.h.b16 %v662
          %v716 = vunpack.c.l.b16 %v663
          %v717 = vunpack.c.h.b16 %v663
          %v718 = vunpack.c.l.b16 %v664
          %v719 = vunpack.c.h.b16 %v664
          %v720 = vunpack.c.l.b16 %v665
          %v721 = vunpack.c.h.b16 %v665
          %v722 = vunpack.c.l.b16 %v666
          %v723 = vunpack.c.h.b16 %v666
          %v724 = vunpack.c.l.b16 %v667
          %v725 = vunpack.c.h.b16 %v667
          %v726 = vunpack.c.l.b16 %v668
          %v727 = vunpack.c.h.b16 %v668
          %v728 = vunpack.c.l.b16 %v669
          %v729 = vunpack.c.h.b16 %v669
          %v730 = vunpack.c.l.b16 %v670
          %v731 = vunpack.c.h.b16 %v670
          %v732 = vunpack.c.l.b16 %v671
          %v733 = vunpack.c.h.b16 %v671
          %v734 = vunpack.c.l.b16 %v672
          %v735 = vunpack.c.h.b16 %v672
          %v736 = vunpack.c.l.b16 %v673
          %v737 = vunpack.c.h.b16 %v673
          %v738 = vunpack.c.l.b16 %v674
          %v739 = vunpack.c.h.b16 %v674
          %v740 = vpack.c.b16 %v710, %v708
          %v741 = vpack.c.b16 %v711, %v709
          %v742 = vpack.c.b16 %v714, %v712
          %v743 = vpack.c.b16 %v715, %v713
          %v744 = vpack.c.b16 %v718, %v716
          %v745 = vpack.c.b16 %v719, %v717
          %v746 = vpack.c.b16 %v722, %v720
          %v747 = vpack.c.b16 %v723, %v721
          %v748 = vpack.c.b16 %v726, %v724
          %v749 = vpack.c.b16 %v727, %v725
          %v750 = vpack.c.b16 %v730, %v728
          %v751 = vpack.c.b16 %v731, %v729
          %v752 = vpack.c.b16 %v734, %v732
          %v753 = vpack.c.b16 %v735, %v733
          %v754 = vpack.c.b16 %v738, %v736
          %v755 = vpack.c.b16 %v739, %v737
          %772 = vmatprep.subr.bf16.mxu0 0
          %773 = vmatpush1.bf16.msra.mxu0 %v676
          %774 = vmatprep.subr.bf16.mxu0 0
          %775 = vmatpush1.bf16.msra.mxu0 %v677
          %776 = vmatprep.subr.bf16.mxu0 0
          %777 = vmatpush1.bf16.msra.mxu0 %v678
          %778 = vmatprep.subr.bf16.mxu0 0
          %779 = vmatpush1.bf16.msra.mxu0 %v679
          %780 = vmatprep.subr.bf16.mxu0 0
          %781 = vmatpush1.bf16.msra.mxu0 %v680
          %782 = vmatprep.subr.bf16.mxu0 0
          %783 = vmatpush1.bf16.msra.mxu0 %v681
          %784 = vmatprep.subr.bf16.mxu0 0
          %785 = vmatpush1.bf16.msra.mxu0 %v682
          %786 = vmatprep.subr.bf16.mxu0 0
          %787 = vmatpush1.bf16.msra.mxu0 %v683
          %788 = vmatprep.subr.bf16.mxu0 0
          %789 = vmatpush1.bf16.msra.mxu0 %v684
          %790 = vmatprep.subr.bf16.mxu0 0
          %791 = vmatpush1.bf16.msra.mxu0 %v685
          %792 = vmatprep.subr.bf16.mxu0 0
          %793 = vmatpush1.bf16.msra.mxu0 %v686
          %794 = vmatprep.subr.bf16.mxu0 0
          %795 = vmatpush1.bf16.msra.mxu0 %v687
          %796 = vmatprep.subr.bf16.mxu0 0
          %797 = vmatpush1.bf16.msra.mxu0 %v688
          %798 = vmatprep.subr.bf16.mxu0 0
          %799 = vmatpush1.bf16.msra.mxu0 %v689
          %800 = vmatprep.subr.bf16.mxu0 0
          %801 = vmatpush1.bf16.msra.mxu0 %v690
          %802 = vmatprep.subr.bf16.mxu0 0
          %803 = vmatpush1.bf16.msra.mxu0 %v691
          %804 = vmatprep.mubr.bf16.mxu0 %v741
          %805 = vmatmul.mubr.bf16.gmra.mrb[0].mxu0 %v740
          %v806 = vpop.f32.mrb[0].mxu0
          %v807 = vadd.f32 0.0, %v806
          %v808 = vpop.f32.mrb[0].mxu0
          %v809 = vpop.f32.mrb[0].mxu0
          %v810 = vadd.f32 0.0, %v809
          %v811 = vpop.f32.mrb[0].mxu0
          %812 = vmatprep.mubr.bf16.mxu0 %v743
          %813 = vmatmul.mubr.bf16.gmra.mrb[0].mxu0 %v742
          %v814 = vpop.f32.mrb[0].mxu0
          %v815 = vadd.f32 0.0, %v814
          %v816 = vpop.f32.mrb[0].mxu0
          %v817 = vpop.f32.mrb[0].mxu0
          %v818 = vadd.f32 0.0, %v817
          %v819 = vpop.f32.mrb[0].mxu0
          %820 = vmatprep.mubr.bf16.mxu0 %v745
          %821 = vmatmul.mubr.bf16.gmra.mrb[0].mxu0 %v744
          %v822 = vpop.f32.mrb[0].mxu0
          %v823 = vadd.f32 0.0, %v822
          %v824 = vpop.f32.mrb[0].mxu0
          %v825 = vpop.f32.mrb[0].mxu0
          %v826 = vadd.f32 0.0, %v825
          %v827 = vpop.f32.mrb[0].mxu0
          %828 = vmatprep.mubr.bf16.mxu0 %v747
          %829 = vmatmul.mubr.bf16.gmra.mrb[0].mxu0 %v746
          %v830 = vpop.f32.mrb[0].mxu0
          %v831 = vadd.f32 0.0, %v830
          %v832 = vpop.f32.mrb[0].mxu0
          %v833 = vpop.f32.mrb[0].mxu0
          %v834 = vadd.f32 0.0, %v833
          %v835 = vpop.f32.mrb[0].mxu0
          %836 = vmatprep.mubr.bf16.mxu0 %v749
          %837 = vmatmul.mubr.bf16.gmra.mrb[0].mxu0 %v748
          %v838 = vpop.f32.mrb[0].mxu0
          %v839 = vadd.f32 0.0, %v838
          %v840 = vpop.f32.mrb[0].mxu0
          %v841 = vpop.f32.mrb[0].mxu0
          %v842 = vadd.f32 0.0, %v841
          %v843 = vpop.f32.mrb[0].mxu0
          %844 = vmatprep.mubr.bf16.mxu0 %v751
          %845 = vmatmul.mubr.bf16.gmra.mrb[0].mxu0 %v750
          %v846 = vpop.f32.mrb[0].mxu0
          %v847 = vadd.f32 0.0, %v846
          %v848 = vpop.f32.mrb[0].mxu0
          %v849 = vpop.f32.mrb[0].mxu0
          %v850 = vadd.f32 0.0, %v849
          %v851 = vpop.f32.mrb[0].mxu0
          %852 = vmatprep.mubr.bf16.mxu0 %v753
          %853 = vmatmul.mubr.bf16.gmra.mrb[0].mxu0 %v752
          %v854 = vpop.f32.mrb[0].mxu0
          %v855 = vadd.f32 0.0, %v854
          %v856 = vpop.f32.mrb[0].mxu0
          %v857 = vpop.f32.mrb[0].mxu0
          %v858 = vadd.f32 0.0, %v857
          %v859 = vpop.f32.mrb[0].mxu0
          %860 = vmatprep.mubr.bf16.mxu0 %v755
          %861 = vmatmul.mubr.bf16.gmra.mrb[0].mxu0 %v754
          %v862 = vpop.f32.mrb[0].mxu0
          %v863 = vadd.f32 0.0, %v862
          %v864 = vpop.f32.mrb[0].mxu0
          %v865 = vpop.f32.mrb[0].mxu0
          %v866 = vadd.f32 0.0, %v865
          %v867 = vpop.f32.mrb[0].mxu0
          %868 = vdwg.mxu0
          %v869 = vpack.c.bf16 %v810, %v807
          %v870 = vpack.c.bf16 %v818, %v815
          %v871 = vpack.c.bf16 %v826, %v823
          %v872 = vpack.c.bf16 %v834, %v831
          %v873 = vpack.c.bf16 %v842, %v839
          %v874 = vpack.c.bf16 %v850, %v847
          %v875 = vpack.c.bf16 %v858, %v855
          %v876 = vpack.c.bf16 %v866, %v863
          %877 = vst [vmem:[#allocation3] sm:$0xff] %v869
          %878 = vst [vmem:[#allocation3 + $0x8] sm:$0xff] %v870
          %879 = vst [vmem:[#allocation3 + $0x10] sm:$0xff] %v871
          %880 = vst [vmem:[#allocation3 + $0x18] sm:$0xff] %v872
          %881 = vst [vmem:[#allocation3 + $0x20] sm:$0xff] %v873
          %882 = vst [vmem:[#allocation3 + $0x28] sm:$0xff] %v874
          %883 = vst [vmem:[#allocation3 + $0x30] sm:$0xff] %v875
          %884 = vst [vmem:[#allocation3 + $0x38] sm:$0xff] %v876
          %s885 = sadd.s32 %s22, 1
          %p886 = scmp.lt.s32.totalorder %s885, 3
          // Predicated region
          $region53: #{hoa_forward.1} parent=51 // pred_check
            %p887 = pneg %p886
          $region54: #{hoa_forward.1} parent=51 // pred_check_branch
            %889 = sbr.rel (%p887) target = $region56
          $region55: #{hoa_forward.1} parent=51 // pred_region
            %s890 = sshra.s32 %s304, 4
            %s891 = sand.u32 %s304, 15
            %s892 = smul.addr %s890, 8
            %s893 = scalar_lea.vmem [#allocation2], %s892
            %894 = vst [vmem:[%s893] sm:$0xff] %v869
            %895 = vst [vmem:[%s893 + $0x8] sm:$0xff] %v870
            %896 = vst [vmem:[%s893 + $0x10] sm:$0xff] %v871
            %897 = vst [vmem:[%s893 + $0x18] sm:$0xff] %v872
            %898 = vst [vmem:[%s893 + $0x20] sm:$0xff] %v873
            %899 = vst [vmem:[%s893 + $0x28] sm:$0xff] %v874
            %900 = vst [vmem:[%s893 + $0x30] sm:$0xff] %v875
            %901 = vst [vmem:[%s893 + $0x38] sm:$0xff] %v876
          $region56: #{hoa_forward.1} parent=51 // pred_fallthru
            _
        $region52: #{hoa_forward.1} parent=35 // pred_fallthru
          _
        %v902 = vld [vmem:[#allocation3] sm:$0xff]
        %v903 = vld [vmem:[#allocation3 + $0x8] sm:$0xff]
        %v904 = vld [vmem:[#allocation3 + $0x10] sm:$0xff]
        %v905 = vld [vmem:[#allocation3 + $0x18] sm:$0xff]
        %v906 = vld [vmem:[#allocation3 + $0x20] sm:$0xff]
        %v907 = vld [vmem:[#allocation3 + $0x28] sm:$0xff]
        %v908 = vld [vmem:[#allocation3 + $0x30] sm:$0xff]
        %v909 = vld [vmem:[#allocation3 + $0x38] sm:$0xff]
        %v910 = vld [vmem:[%s301] sm:$0x7]
        %v911 = vld [vmem:[%s297] sm:$0xf]
        %v912 = vld [vmem:[%s297 + $0x4] sm:$0xf]
        %v913 = vld [vmem:[%s297 + $0x8] sm:$0xf]
        %v914 = vld [vmem:[%s297 + $0xc] sm:$0xf]
        %v915 = vld [vmem:[%s297 + $0x10] sm:$0xf]
        %v916 = vld [vmem:[%s297 + $0x14] sm:$0xf]
        %v917 = vld [vmem:[%s297 + $0x18] sm:$0xf]
        %v918 = vld [vmem:[%s297 + $0x1c] sm:$0xf]
        %v919 = vld [vmem:[%s297 + $0x20] sm:$0xf]
        %v920 = vld [vmem:[%s297 + $0x24] sm:$0xf]
        %v921 = vld [vmem:[%s297 + $0x28] sm:$0xf]
        %v922 = vld [vmem:[%s297 + $0x2c] sm:$0xf]
        %v923 = vld [vmem:[%s297 + $0x30] sm:$0xf]
        %v924 = vld [vmem:[%s297 + $0x34] sm:$0xf]
        %v925 = vld [vmem:[%s297 + $0x38] sm:$0xf]
        %v926 = vld [vmem:[%s297 + $0x3c] sm:$0xf]
        %v927 = vlaneseq
        %v928 = vshrl.u32 %v927, 7
        %v929 = vsub.s32 0, %v928
        %v930 = vrot.slane %v910, %v929
        %v947 = vunpack.c.l.b16 %v911
        %v948 = vunpack.c.l.b16 %v912
        %v949 = vunpack.c.l.b16 %v913
        %v950 = vunpack.c.l.b16 %v914
        %v951 = vunpack.c.l.b16 %v915
        %v952 = vunpack.c.l.b16 %v916
        %v953 = vunpack.c.l.b16 %v917
        %v954 = vunpack.c.l.b16 %v918
        %v955 = vunpack.c.l.b16 %v919
        %v956 = vunpack.c.l.b16 %v920
        %v957 = vunpack.c.l.b16 %v921
        %v958 = vunpack.c.l.b16 %v922
        %v959 = vunpack.c.l.b16 %v923
        %v960 = vunpack.c.l.b16 %v924
        %v961 = vunpack.c.l.b16 %v925
        %v962 = vunpack.c.l.b16 %v926
        %v963 = vpack.c.b16 %v948, %v947
        %v964 = vpack.c.b16 %v950, %v949
        %v965 = vpack.c.b16 %v952, %v951
        %v966 = vpack.c.b16 %v954, %v953
        %v967 = vpack.c.b16 %v956, %v955
        %v968 = vpack.c.b16 %v958, %v957
        %v969 = vpack.c.b16 %v960, %v959
        %v970 = vpack.c.b16 %v962, %v961
        %979 = vmatprep.subr.bf16.mxu0 0
        %980 = vmatpush1.bf16.msra.mxu0 %v963
        %981 = vmatprep.subr.bf16.mxu0 0
        %982 = vmatpush1.bf16.msra.mxu0 %v964
        %983 = vmatprep.subr.bf16.mxu0 0
        %984 = vmatpush1.bf16.msra.mxu0 %v965
        %985 = vmatprep.subr.bf16.mxu0 0
        %986 = vmatpush1.bf16.msra.mxu0 %v966
        %987 = vmatprep.subr.bf16.mxu0 0
        %988 = vmatpush1.bf16.msra.mxu0 %v967
        %989 = vmatprep.subr.bf16.mxu0 0
        %990 = vmatpush1.bf16.msra.mxu0 %v968
        %991 = vmatprep.subr.bf16.mxu0 0
        %992 = vmatpush1.bf16.msra.mxu0 %v969
        %993 = vmatprep.subr.bf16.mxu0 0
        %994 = vmatpush1.bf16.msra.mxu0 %v970
        %995 = vmatprep.subr.bf16.mxu0 0
        %996 = vmatpush1.bf16.msra.mxu0 0
        %997 = vmatprep.subr.bf16.mxu0 0
        %998 = vmatpush1.bf16.msra.mxu0 0
        %999 = vmatprep.subr.bf16.mxu0 0
        %1000 = vmatpush1.bf16.msra.mxu0 0
        %1001 = vmatprep.subr.bf16.mxu0 0
        %1002 = vmatpush1.bf16.msra.mxu0 0
        %1003 = vmatprep.subr.bf16.mxu0 0
        %1004 = vmatpush1.bf16.msra.mxu0 0
        %1005 = vmatprep.subr.bf16.mxu0 0
        %1006 = vmatpush1.bf16.msra.mxu0 0
        %1007 = vmatprep.subr.bf16.mxu0 0
        %1008 = vmatpush1.bf16.msra.mxu0 0
        %1009 = vmatprep.subr.bf16.mxu0 0
        %1010 = vmatpush1.bf16.msra.mxu0 0
        %1011 = vmatprep.mubr.bf16.mxu0 0
        %1012 = vmatmul.mubr.bf16.gmra.mrb[0].mxu0 %v902
        %v1013 = vpop.f32.mrb[0].mxu0
        %v1014 = vadd.f32 %v930, %v1013
        %v1015 = vpop.f32.mrb[0].mxu0
        %v1016 = vpop.f32.mrb[0].mxu0
        %v1017 = vadd.f32 %v930, %v1016
        %v1018 = vpop.f32.mrb[0].mxu0
        %1019 = vmatprep.mubr.bf16.mxu0 0
        %1020 = vmatmul.mubr.bf16.gmra.mrb[0].mxu0 %v903
        %v1021 = vpop.f32.mrb[0].mxu0
        %v1022 = vadd.f32 %v930, %v1021
        %v1023 = vpop.f32.mrb[0].mxu0
        %v1024 = vpop.f32.mrb[0].mxu0
        %v1025 = vadd.f32 %v930, %v1024
        %v1026 = vpop.f32.mrb[0].mxu0
        %1027 = vmatprep.mubr.bf16.mxu0 0
        %1028 = vmatmul.mubr.bf16.gmra.mrb[0].mxu0 %v904
        %v1029 = vpop.f32.mrb[0].mxu0
        %v1030 = vadd.f32 %v930, %v1029
        %v1031 = vpop.f32.mrb[0].mxu0
        %v1032 = vpop.f32.mrb[0].mxu0
        %v1033 = vadd.f32 %v930, %v1032
        %v1034 = vpop.f32.mrb[0].mxu0
        %1035 = vmatprep.mubr.bf16.mxu0 0
        %1036 = vmatmul.mubr.bf16.gmra.mrb[0].mxu0 %v905
        %v1037 = vpop.f32.mrb[0].mxu0
        %v1038 = vadd.f32 %v930, %v1037
        %v1039 = vpop.f32.mrb[0].mxu0
        %v1040 = vpop.f32.mrb[0].mxu0
        %v1041 = vadd.f32 %v930, %v1040
        %v1042 = vpop.f32.mrb[0].mxu0
        %1043 = vmatprep.mubr.bf16.mxu0 0
        %1044 = vmatmul.mubr.bf16.gmra.mrb[0].mxu0 %v906
        %v1045 = vpop.f32.mrb[0].mxu0
        %v1046 = vadd.f32 %v930, %v1045
        %v1047 = vpop.f32.mrb[0].mxu0
        %v1048 = vpop.f32.mrb[0].mxu0
        %v1049 = vadd.f32 %v930, %v1048
        %v1050 = vpop.f32.mrb[0].mxu0
        %1051 = vmatprep.mubr.bf16.mxu0 0
        %1052 = vmatmul.mubr.bf16.gmra.mrb[0].mxu0 %v907
        %v1053 = vpop.f32.mrb[0].mxu0
        %v1054 = vadd.f32 %v930, %v1053
        %v1055 = vpop.f32.mrb[0].mxu0
        %v1056 = vpop.f32.mrb[0].mxu0
        %v1057 = vadd.f32 %v930, %v1056
        %v1058 = vpop.f32.mrb[0].mxu0
        %1059 = vmatprep.mubr.bf16.mxu0 0
        %1060 = vmatmul.mubr.bf16.gmra.mrb[0].mxu0 %v908
        %v1061 = vpop.f32.mrb[0].mxu0
        %v1062 = vadd.f32 %v930, %v1061
        %v1063 = vpop.f32.mrb[0].mxu0
        %v1064 = vpop.f32.mrb[0].mxu0
        %v1065 = vadd.f32 %v930, %v1064
        %v1066 = vpop.f32.mrb[0].mxu0
        %1067 = vmatprep.mubr.bf16.mxu0 0
        %1068 = vmatmul.mubr.bf16.gmra.mrb[0].mxu0 %v909
        %v1069 = vpop.f32.mrb[0].mxu0
        %v1070 = vadd.f32 %v930, %v1069
        %v1071 = vpop.f32.mrb[0].mxu0
        %v1072 = vpop.f32.mrb[0].mxu0
        %v1073 = vadd.f32 %v930, %v1072
        %v1074 = vpop.f32.mrb[0].mxu0
        %1075 = vdwg.mxu0
        %v1076 = vmax.f32 %v1014, 0.0
        %v1077 = vmax.f32 %v1017, 0.0
        %v1078 = vmax.f32 %v1022, 0.0
        %v1079 = vmax.f32 %v1025, 0.0
        %v1080 = vmax.f32 %v1030, 0.0
        %v1081 = vmax.f32 %v1033, 0.0
        %v1082 = vmax.f32 %v1038, 0.0
        %v1083 = vmax.f32 %v1041, 0.0
        %v1084 = vmax.f32 %v1046, 0.0
        %v1085 = vmax.f32 %v1049, 0.0
        %v1086 = vmax.f32 %v1054, 0.0
        %v1087 = vmax.f32 %v1057, 0.0
        %v1088 = vmax.f32 %v1062, 0.0
        %v1089 = vmax.f32 %v1065, 0.0
        %v1090 = vmax.f32 %v1070, 0.0
        %v1091 = vmax.f32 %v1073, 0.0
        %1092 = vadd.xlane.f32.xlu0 %v1076
        %v1093 = vpop.xlane.xlu0 %1092
        %1094 = vadd.xlane.f32.xlu0 %v1077
        %v1095 = vpop.xlane.xlu0 %1094
        %1096 = vadd.xlane.f32.xlu0 %v1078
        %v1097 = vpop.xlane.xlu0 %1096
        %1098 = vadd.xlane.f32.xlu0 %v1079
        %v1099 = vpop.xlane.xlu0 %1098
        %1100 = vadd.xlane.f32.xlu0 %v1080
        %v1101 = vpop.xlane.xlu0 %1100
        %1102 = vadd.xlane.f32.xlu0 %v1081
        %v1103 = vpop.xlane.xlu0 %1102
        %1104 = vadd.xlane.f32.xlu0 %v1082
        %v1105 = vpop.xlane.xlu0 %1104
        %1106 = vadd.xlane.f32.xlu0 %v1083
        %v1107 = vpop.xlane.xlu0 %1106
        %1108 = vadd.xlane.f32.xlu0 %v1084
        %v1109 = vpop.xlane.xlu0 %1108
        %1110 = vadd.xlane.f32.xlu0 %v1085
        %v1111 = vpop.xlane.xlu0 %1110
        %1112 = vadd.xlane.f32.xlu0 %v1086
        %v1113 = vpop.xlane.xlu0 %1112
        %1114 = vadd.xlane.f32.xlu0 %v1087
        %v1115 = vpop.xlane.xlu0 %1114
        %1116 = vadd.xlane.f32.xlu0 %v1088
        %v1117 = vpop.xlane.xlu0 %1116
        %1118 = vadd.xlane.f32.xlu0 %v1089
        %v1119 = vpop.xlane.xlu0 %1118
        %1120 = vadd.xlane.f32.xlu0 %v1090
        %v1121 = vpop.xlane.xlu0 %1120
        %1122 = vadd.xlane.f32.xlu0 %v1091
        %v1123 = vpop.xlane.xlu0 %1122
        %v1124 = vmul.f32 %v1076, %v1076
        %v1125 = vmul.f32 %v1077, %v1077
        %v1126 = vmul.f32 %v1078, %v1078
        %v1127 = vmul.f32 %v1079, %v1079
        %v1128 = vmul.f32 %v1080, %v1080
        %v1129 = vmul.f32 %v1081, %v1081
        %v1130 = vmul.f32 %v1082, %v1082
        %v1131 = vmul.f32 %v1083, %v1083
        %v1132 = vmul.f32 %v1084, %v1084
        %v1133 = vmul.f32 %v1085, %v1085
        %v1134 = vmul.f32 %v1086, %v1086
        %v1135 = vmul.f32 %v1087, %v1087
        %v1136 = vmul.f32 %v1088, %v1088
        %v1137 = vmul.f32 %v1089, %v1089
        %v1138 = vmul.f32 %v1090, %v1090
        %v1139 = vmul.f32 %v1091, %v1091
        %1140 = vadd.xlane.f32.xlu0 %v1124
        %v1141 = vpop.xlane.xlu0 %1140
        %1142 = vadd.xlane.f32.xlu0 %v1125
        %v1143 = vpop.xlane.xlu0 %1142
        %1144 = vadd.xlane.f32.xlu0 %v1126
        %v1145 = vpop.xlane.xlu0 %1144
        %1146 = vadd.xlane.f32.xlu0 %v1127
        %v1147 = vpop.xlane.xlu0 %1146
        %1148 = vadd.xlane.f32.xlu0 %v1128
        %v1149 = vpop.xlane.xlu0 %1148
        %1150 = vadd.xlane.f32.xlu0 %v1129
        %v1151 = vpop.xlane.xlu0 %1150
        %1152 = vadd.xlane.f32.xlu0 %v1130
        %v1153 = vpop.xlane.xlu0 %1152
        %1154 = vadd.xlane.f32.xlu0 %v1131
        %v1155 = vpop.xlane.xlu0 %1154
        %1156 = vadd.xlane.f32.xlu0 %v1132
        %v1157 = vpop.xlane.xlu0 %1156
        %1158 = vadd.xlane.f32.xlu0 %v1133
        %v1159 = vpop.xlane.xlu0 %1158
        %1160 = vadd.xlane.f32.xlu0 %v1134
        %v1161 = vpop.xlane.xlu0 %1160
        %1162 = vadd.xlane.f32.xlu0 %v1135
        %v1163 = vpop.xlane.xlu0 %1162
        %1164 = vadd.xlane.f32.xlu0 %v1136
        %v1165 = vpop.xlane.xlu0 %1164
        %1166 = vadd.xlane.f32.xlu0 %v1137
        %v1167 = vpop.xlane.xlu0 %1166
        %1168 = vadd.xlane.f32.xlu0 %v1138
        %v1169 = vpop.xlane.xlu0 %1168
        %1170 = vadd.xlane.f32.xlu0 %v1139
        %v1171 = vpop.xlane.xlu0 %1170
        %v1172 = vmul.f32 %v1093, 0.0078125
        %v1173 = vmul.f32 %v1095, 0.0078125
        %v1174 = vmul.f32 %v1097, 0.0078125
        %v1175 = vmul.f32 %v1099, 0.0078125
        %v1176 = vmul.f32 %v1101, 0.0078125
        %v1177 = vmul.f32 %v1103, 0.0078125
        %v1178 = vmul.f32 %v1105, 0.0078125
        %v1179 = vmul.f32 %v1107, 0.0078125
        %v1180 = vmul.f32 %v1109, 0.0078125
        %v1181 = vmul.f32 %v1111, 0.0078125
        %v1182 = vmul.f32 %v1113, 0.0078125
        %v1183 = vmul.f32 %v1115, 0.0078125
        %v1184 = vmul.f32 %v1117, 0.0078125
        %v1185 = vmul.f32 %v1119, 0.0078125
        %v1186 = vmul.f32 %v1121, 0.0078125
        %v1187 = vmul.f32 %v1123, 0.0078125
        %v1188 = vmul.f32 %v1141, 0.0078125
        %v1189 = vmul.f32 %v1143, 0.0078125
        %v1190 = vmul.f32 %v1145, 0.0078125
        %v1191 = vmul.f32 %v1147, 0.0078125
        %v1192 = vmul.f32 %v1149, 0.0078125
        %v1193 = vmul.f32 %v1151, 0.0078125
        %v1194 = vmul.f32 %v1153, 0.0078125
        %v1195 = vmul.f32 %v1155, 0.0078125
        %v1196 = vmul.f32 %v1157, 0.0078125
        %v1197 = vmul.f32 %v1159, 0.0078125
        %v1198 = vmul.f32 %v1161, 0.0078125
        %v1199 = vmul.f32 %v1163, 0.0078125
        %v1200 = vmul.f32 %v1165, 0.0078125
        %v1201 = vmul.f32 %v1167, 0.0078125
        %v1202 = vmul.f32 %v1169, 0.0078125
        %v1203 = vmul.f32 %v1171, 0.0078125
        %v1204 = vmul.f32 %v1172, %v1172
        %v1205 = vmul.f32 %v1173, %v1173
        %v1206 = vmul.f32 %v1174, %v1174
        %v1207 = vmul.f32 %v1175, %v1175
        %v1208 = vmul.f32 %v1176, %v1176
        %v1209 = vmul.f32 %v1177, %v1177
        %v1210 = vmul.f32 %v1178, %v1178
        %v1211 = vmul.f32 %v1179, %v1179
        %v1212 = vmul.f32 %v1180, %v1180
        %v1213 = vmul.f32 %v1181, %v1181
        %v1214 = vmul.f32 %v1182, %v1182
        %v1215 = vmul.f32 %v1183, %v1183
        %v1216 = vmul.f32 %v1184, %v1184
        %v1217 = vmul.f32 %v1185, %v1185
        %v1218 = vmul.f32 %v1186, %v1186
        %v1219 = vmul.f32 %v1187, %v1187
        %v1220 = vsub.f32 %v1188, %v1204
        %v1221 = vsub.f32 %v1189, %v1205
        %v1222 = vsub.f32 %v1190, %v1206
        %v1223 = vsub.f32 %v1191, %v1207
        %v1224 = vsub.f32 %v1192, %v1208
        %v1225 = vsub.f32 %v1193, %v1209
        %v1226 = vsub.f32 %v1194, %v1210
        %v1227 = vsub.f32 %v1195, %v1211
        %v1228 = vsub.f32 %v1196, %v1212
        %v1229 = vsub.f32 %v1197, %v1213
        %v1230 = vsub.f32 %v1198, %v1214
        %v1231 = vsub.f32 %v1199, %v1215
        %v1232 = vsub.f32 %v1200, %v1216
        %v1233 = vsub.f32 %v1201, %v1217
        %v1234 = vsub.f32 %v1202, %v1218
        %v1235 = vsub.f32 %v1203, %v1219
        %v1236 = vadd.f32 %v1220, 1e-09
        %v1237 = vadd.f32 %v1221, 1e-09
        %v1238 = vadd.f32 %v1222, 1e-09
        %v1239 = vadd.f32 %v1223, 1e-09
        %v1240 = vadd.f32 %v1224, 1e-09
        %v1241 = vadd.f32 %v1225, 1e-09
        %v1242 = vadd.f32 %v1226, 1e-09
        %v1243 = vadd.f32 %v1227, 1e-09
        %v1244 = vadd.f32 %v1228, 1e-09
        %v1245 = vadd.f32 %v1229, 1e-09
        %v1246 = vadd.f32 %v1230, 1e-09
        %v1247 = vadd.f32 %v1231, 1e-09
        %v1248 = vadd.f32 %v1232, 1e-09
        %v1249 = vadd.f32 %v1233, 1e-09
        %v1250 = vadd.f32 %v1234, 1e-09
        %v1251 = vadd.f32 %v1235, 1e-09
        %v1252 = vrsqrt.pop %v1236
        %v1253 = vrsqrt.pop %v1237
        %v1254 = vrsqrt.pop %v1238
        %v1255 = vrsqrt.pop %v1239
        %v1256 = vrsqrt.pop %v1240
        %v1257 = vrsqrt.pop %v1241
        %v1258 = vrsqrt.pop %v1242
        %v1259 = vrsqrt.pop %v1243
        %v1260 = vrsqrt.pop %v1244
        %v1261 = vrsqrt.pop %v1245
        %v1262 = vrsqrt.pop %v1246
        %v1263 = vrsqrt.pop %v1247
        %v1264 = vrsqrt.pop %v1248
        %v1265 = vrsqrt.pop %v1249
        %v1266 = vrsqrt.pop %v1250
        %v1267 = vrsqrt.pop %v1251
        %v1268 = vlaneseq
        %v1269 = vshrl.u32 %v1268, 7
        %v1270 = vsub.s32 1, %v1269
        %v1271 = vrot.slane %v910, %v1270
        %v1272 = vmul.f32 %v1271, %v1252
        %v1273 = vmul.f32 %v1271, %v1253
        %v1274 = vmul.f32 %v1271, %v1254
        %v1275 = vmul.f32 %v1271, %v1255
        %v1276 = vmul.f32 %v1271, %v1256
        %v1277 = vmul.f32 %v1271, %v1257
        %v1278 = vmul.f32 %v1271, %v1258
        %v1279 = vmul.f32 %v1271, %v1259
        %v1280 = vmul.f32 %v1271, %v1260
        %v1281 = vmul.f32 %v1271, %v1261
        %v1282 = vmul.f32 %v1271, %v1262
        %v1283 = vmul.f32 %v1271, %v1263
        %v1284 = vmul.f32 %v1271, %v1264
        %v1285 = vmul.f32 %v1271, %v1265
        %v1286 = vmul.f32 %v1271, %v1266
        %v1287 = vmul.f32 %v1271, %v1267
        %v1288 = vsub.f32 %v1076, %v1172
        %v1289 = vsub.f32 %v1077, %v1173
        %v1290 = vsub.f32 %v1078, %v1174
        %v1291 = vsub.f32 %v1079, %v1175
        %v1292 = vsub.f32 %v1080, %v1176
        %v1293 = vsub.f32 %v1081, %v1177
        %v1294 = vsub.f32 %v1082, %v1178
        %v1295 = vsub.f32 %v1083, %v1179
        %v1296 = vsub.f32 %v1084, %v1180
        %v1297 = vsub.f32 %v1085, %v1181
        %v1298 = vsub.f32 %v1086, %v1182
        %v1299 = vsub.f32 %v1087, %v1183
        %v1300 = vsub.f32 %v1088, %v1184
        %v1301 = vsub.f32 %v1089, %v1185
        %v1302 = vsub.f32 %v1090, %v1186
        %v1303 = vsub.f32 %v1091, %v1187
        %v1304 = vmul.f32 %v1288, %v1272
        %v1305 = vmul.f32 %v1289, %v1273
        %v1306 = vmul.f32 %v1290, %v1274
        %v1307 = vmul.f32 %v1291, %v1275
        %v1308 = vmul.f32 %v1292, %v1276
        %v1309 = vmul.f32 %v1293, %v1277
        %v1310 = vmul.f32 %v1294, %v1278
        %v1311 = vmul.f32 %v1295, %v1279
        %v1312 = vmul.f32 %v1296, %v1280
        %v1313 = vmul.f32 %v1297, %v1281
        %v1314 = vmul.f32 %v1298, %v1282
        %v1315 = vmul.f32 %v1299, %v1283
        %v1316 = vmul.f32 %v1300, %v1284
        %v1317 = vmul.f32 %v1301, %v1285
        %v1318 = vmul.f32 %v1302, %v1286
        %v1319 = vmul.f32 %v1303, %v1287
        %v1320 = vlaneseq
        %v1321 = vshrl.u32 %v1320, 7
        %v1322 = vsub.s32 2, %v1321
        %v1323 = vrot.slane %v910, %v1322
        %v1324 = vadd.f32 %v1304, %v1323
        %v1325 = vadd.f32 %v1305, %v1323
        %v1326 = vadd.f32 %v1306, %v1323
        %v1327 = vadd.f32 %v1307, %v1323
        %v1328 = vadd.f32 %v1308, %v1323
        %v1329 = vadd.f32 %v1309, %v1323
        %v1330 = vadd.f32 %v1310, %v1323
        %v1331 = vadd.f32 %v1311, %v1323
        %v1332 = vadd.f32 %v1312, %v1323
        %v1333 = vadd.f32 %v1313, %v1323
        %v1334 = vadd.f32 %v1314, %v1323
        %v1335 = vadd.f32 %v1315, %v1323
        %v1336 = vadd.f32 %v1316, %v1323
        %v1337 = vadd.f32 %v1317, %v1323
        %v1338 = vadd.f32 %v1318, %v1323
        %v1339 = vadd.f32 %v1319, %v1323
        %1340 = vst [vmem:[%s271] sm:$0xff] %v1324
        %1341 = vst [vmem:[%s271 + $0x8] sm:$0xff] %v1325
        %1342 = vst [vmem:[%s271 + $0x10] sm:$0xff] %v1326
        %1343 = vst [vmem:[%s271 + $0x18] sm:$0xff] %v1327
        %1344 = vst [vmem:[%s271 + $0x20] sm:$0xff] %v1328
        %1345 = vst [vmem:[%s271 + $0x28] sm:$0xff] %v1329
        %1346 = vst [vmem:[%s271 + $0x30] sm:$0xff] %v1330
        %1347 = vst [vmem:[%s271 + $0x38] sm:$0xff] %v1331
        %1348 = vst [vmem:[%s271 + $0x40] sm:$0xff] %v1332
        %1349 = vst [vmem:[%s271 + $0x48] sm:$0xff] %v1333
        %1350 = vst [vmem:[%s271 + $0x50] sm:$0xff] %v1334
        %1351 = vst [vmem:[%s271 + $0x58] sm:$0xff] %v1335
        %1352 = vst [vmem:[%s271 + $0x60] sm:$0xff] %v1336
        %1353 = vst [vmem:[%s271 + $0x68] sm:$0xff] %v1337
        %1354 = vst [vmem:[%s271 + $0x70] sm:$0xff] %v1338
        %1355 = vst [vmem:[%s271 + $0x78] sm:$0xff] %v1339
        %s1356 = sand.u32 %s152, 1
        %s1357 = scalar_lea.sflag [#allocation5], %s1356
        %s1358 = sand.u32 %s152, 1
        %s1359 = smul.addr %s1358, 128
        %s1360 = scalar_lea.vmem [#allocation4], %s1359
        // Predicated region
        $region57: #{hoa_forward.1} parent=35 // pred_check
          %p1361 = pneg %p162
        $region58: #{hoa_forward.1} parent=35 // pred_check_branch
          %1363 = sbr.rel (%p1361) target = $region60
        $region59: #{hoa_forward.1} parent=35 // pred_region
          %s1364 = smul.u32 16, %s23
          %s1366 = ssub.s32 2048, 2048
          %1367 = vsyncadd %s1357, %s1366
          %s1368 = smul.addr %s1364, 3
          %s1369 = sadd.s32 %s22, %s1368
          %s1370 = smul.addr %s1369, 128
          %s1371 = scalar_lea.hbm %s4, %s1370
          %s1372 = sshll.u32 %s1360, 4
          %s1373 = int_to_ptr.vmem [resolvable:$true] %s1372
          %1378 = dma.vmem_to_hbm [thread:$0]  %s1373, 2048, %s1371, %s1357, 128, 384, 8
        $region60: #{hoa_forward.1} parent=35 // pred_fallthru
          _
      $region36: #{hoa_forward.1} parent=5 // pred_fallthru
        _
      %p1379 = scmp.le.s32.totalorder 2, %s13
      // Predicated region
      $region61: #{hoa_forward.1} parent=5 // pred_check
        %p1380 = pneg %p1379
      $region62: #{hoa_forward.1} parent=5 // pred_check_branch
        %1382 = sbr.rel (%p1380) target = $region64
      $region63: #{hoa_forward.1} parent=5 // pred_region
        %s1383 = ssub.s32 %s13, 2
        // Predicated region
        $region65: #{hoa_forward.1} parent=63 // pred_check
          %p1384 = pneg %p168
        $region66: #{hoa_forward.1} parent=63 // pred_check_branch
          %1386 = sbr.rel (%p1384) target = $region68
        $region67: #{hoa_forward.1} parent=63 // pred_region
          %s1387 = sand.u32 %s153, 1
          %s1388 = scalar_lea.sflag [#allocation5], %s1387
          %s1389 = sand.u32 %s153, 1
          %s1390 = smul.addr %s1389, 128
          %s1391 = scalar_lea.vmem [#allocation4], %s1390
          %1392 = dma.done %s1388, 2048
        $region68: #{hoa_forward.1} parent=63 // pred_fallthru
          _
      $region64: #{hoa_forward.1} parent=5 // pred_fallthru
        _
    $region6: #{hoa_forward.1} parent=1 // loop_footer
      %s17 = sadd.s32 1, %s13
    $region7: #{hoa_forward.1} parent=1 // loop_footer_branch
      %12 = sbr.rel target = $region3
    $region8: #{hoa_forward.1} parent=1 // loop_exit
      _
    %1393 = vsyncpa [#allocation5], 1
    %s1394 = scalar_lea.sflag [#allocation5], 1
    %1395 = vsyncpa %s1394, 1

</llo_original>
